<compile_context>
chip_gen: v5e
topology: v5e:2x2
jax: 0.10.0
libtpu: 0.0.40
codegen_flags: <defaults>
</compile_context>

<pallas_src>
import functools

import jax
import jax.numpy as jnp
from jax.experimental import pallas as pl
from jax.experimental.pallas import tpu as pltpu

GAMMA = 1.0     # torch.abs(self.gamma) with default gamma=1.0 (not trainable)
BLOCK_N = 512   # samples per grid step (sweepable 512-2048; VMEM footprint is tiny)


def tv7_kernel(xt_ref, u_ref, rep_ref, a_ref, inv_ref, w_ref, o_ref, *, gamma):
    """Per-tile body.

    xt_ref : [D, TN]       x tile, samples on the lane axis
    u_ref  : [J, D]        unit-norm projection vectors (hoisted)
    rep_ref: [J*Pt, J]     row-replication (selection) matrix: row r = e_{r // Pt}
    a_ref  : [J*Pt, 1]     rbf projections of the (pos ++ neg) pivots, flattened
    inv_ref: [J*Pt, 1]     1 / (|max_proj_diff| * |pivot_std|)  (0 in padding rows)
    w_ref  : [8, J*Pt]     signed, mean-scaled kernel weights; rows 1..7 zero
    o_ref  : [1, TN]       score tile
    """
    xt = xt_ref[...]                                               # [D, TN] f32
    u = u_ref[...]                                                 # [J, D]  f32

    # --- point-side RBF projection on the MXU ------------------------------
    # ||u_j - x_n||^2 = 1 + ||x_n||^2 - 2 * u_j . x_n    (||u_j|| == 1)
    ux = jnp.dot(u, xt, preferred_element_type=jnp.float32)        # [J, TN]   MXU
    x2 = jnp.sum(xt * xt, axis=0, keepdims=True)                   # [1, TN]   XLU
    d2 = jnp.maximum(1.0 + x2 - 2.0 * ux, 0.0)                     # clamp cancellation
    proj = jnp.exp(-gamma * d2)                                    # [J, TN]   EUP

    # replicate each vector's projection once per pivot along sublanes, via a
    # tiny selection matmul (keeps everything 2-D, exp stays at [J, TN]).
    proj_rep = jnp.dot(rep_ref[...], proj,
                       preferred_element_type=jnp.float32)         # [J*Pt, TN]

    # use_score='lin' with 'max-detached' normalization and kernel weighting:
    # relu(1 - |(proj - a)/max_diff / std|) == relu(1 - |proj - a| * inv)
    t = jnp.maximum(1.0 - jnp.abs(proj_rep - a_ref[...]) * inv_ref[...], 0.0)

    # fused: 1/(1+|w|) weighting, mean over pivots, mean over vectors and the
    # (p_score - n_score) sign, all as one small MXU contraction.
    acc = jnp.dot(w_ref[...], t, preferred_element_type=jnp.float32)   # [8, TN]

    # use_svm_score=False -> score = (1 + p - n) / 2 ; (p - n) is row 0 of acc.
    o_ref[...] = 0.5 + 0.5 * acc[0:1, :]


def tv7_forward(x, vectors, p_pivots, n_pivots, pivot_std, score_weight,
                max_proj_diff_p, max_proj_diff_n, *, gamma=GAMMA, block_n=BLOCK_N):
    N, D = x.shape
    J = vectors.shape[0]
    Pp = p_pivots.shape[0]
    Pn = n_pivots.shape[0]
    f32 = jnp.float32
    g = abs(float(gamma))

    # ---------- grid-invariant precompute, hoisted out of the kernel ----------
    u = (vectors / jnp.linalg.norm(vectors, axis=1, keepdims=True)).astype(f32)
    proj_pp = rbf_proj_ref(vectors, p_pivots, g)                   # [J, Pp]
    proj_pn = rbf_proj_ref(vectors, n_pivots, g)                   # [J, Pn]

    std_p, std_n = pivot_std[:, :Pp], pivot_std[:, Pp:]
    w_p, w_n = score_weight[:, :Pp], score_weight[:, Pp:]

    # |(res / max_diff) / std| == |res| * inv,  inv = 1 / (|max_diff| * |std|)
    inv_p = 1.0 / (jnp.abs(max_proj_diff_p) * jnp.abs(std_p))
    inv_n = 1.0 / (jnp.abs(max_proj_diff_n) * jnp.abs(std_n))
    # signed, mean-scaled kernel weights (fold 1/(1+|w|), both means, p-n sign)
    cw_p = (1.0 / (1.0 + jnp.abs(w_p))) / (J * Pp)
    cw_n = -(1.0 / (1.0 + jnp.abs(w_n))) / (J * Pn)

    a = jnp.concatenate([proj_pp, proj_pn], axis=1).astype(f32)    # [J, Pc]
    inv = jnp.concatenate([inv_p, inv_n], axis=1).astype(f32)
    w = jnp.concatenate([cw_p, cw_n], axis=1).astype(f32)

    # pad the pivot axis to a multiple of 8 (sublane tile). Padded entries have
    # inv = 0 (relu term -> 1) and weight 0, so they contribute nothing.
    Pc = Pp + Pn
    Pt = ((Pc + 7) // 8) * 8
    if Pt != Pc:
        pad = ((0, 0), (0, Pt - Pc))
        a = jnp.pad(a, pad)
        inv = jnp.pad(inv, pad)
        w = jnp.pad(w, pad)

    a_col = a.reshape(J * Pt, 1)
    inv_col = inv.reshape(J * Pt, 1)
    # contraction weights as [8, J*Pt]: row 0 real, rows 1..7 zero, so the
    # in-kernel reduction is a plain 8-row MXU matmul.
    w_mat = jnp.zeros((8, J * Pt), f32).at[0].set(w.reshape(J * Pt))
    # selection matrix replicating each vector row Pt times.
    rep = jnp.repeat(jnp.eye(J, dtype=f32), Pt, axis=0)            # [J*Pt, J]

    xt = x.astype(f32).T                                           # [D, N], samples on lanes

    tn = min(block_n, N)
    assert N % tn == 0, "N must be a multiple of the sample tile"
    assert tn == N or tn % 128 == 0, "sample tile must be lane-aligned"
    grid = (N // tn,)
    inv_map = lambda i: (0, 0)

    out = pl.pallas_call(
        functools.partial(tv7_kernel, gamma=g),
        out_shape=jax.ShapeDtypeStruct((1, N), f32),
        grid_spec=pltpu.PrefetchScalarGridSpec(
            num_scalar_prefetch=0,
            grid=grid,
            in_specs=[
                pl.BlockSpec((D, tn), lambda i: (0, i)),   # x tile (transposed)
                pl.BlockSpec((J, D), inv_map),             # unit vectors
                pl.BlockSpec((J * Pt, J), inv_map),        # replication matrix
                pl.BlockSpec((J * Pt, 1), inv_map),        # pivot projections (flat)
                pl.BlockSpec((J * Pt, 1), inv_map),        # 1/(|max_diff|*|std|)
                pl.BlockSpec((8, J * Pt), inv_map),        # signed scaled weights
            ],
            out_specs=pl.BlockSpec((1, tn), lambda i: (0, i)),
        ),
        compiler_params=pltpu.CompilerParams(
            dimension_semantics=("parallel",)),
    )(xt, u, rep, a_col, inv_col, w_mat)
    return out.reshape(N)


# ---------------- plain-JAX helpers (init_phase2 glue + reference) ----------------

def rbf_proj_ref(vectors, pts, gamma):
    u = vectors / jnp.linalg.norm(vectors, axis=1, keepdims=True)
    d2 = jnp.sum((u[:, None, :] - pts[None, :, :]) ** 2, axis=-1)
    return jnp.exp(-gamma * d2)


def branch_score_ref(proj_point, proj_pivot, max_diff, std, weight):
    diff = (proj_point[:, None, :] - proj_pivot[:, :, None]) / max_diff[:, :, None]
    s = jnp.maximum(1.0 - jnp.abs(diff / std[:, :, None]), 0.0)
    s = (1.0 / (1.0 + jnp.abs(weight)))[:, :, None] * s
    return jnp.mean(jnp.mean(s, axis=1), axis=0)


if __name__ == "__main__":
    N, D = 1024, 32         # n samples, d_in (categories=[] so no extra dims)
    J = 8                   # n_vectors
    n_kernel = 16
    Pp = n_kernel // 2
    Pn = n_kernel - Pp

    key = jax.random.PRNGKey(0)
    k_x, k_v, k_pp, k_pn, k_std = jax.random.split(key, 5)

    x = jax.random.normal(k_x, (N, D), dtype=jnp.float32)             # x_num (x_cat=None)
    vectors = jax.random.normal(k_v, (J, D), dtype=jnp.float32)
    vectors = vectors / jnp.linalg.norm(vectors, axis=1, keepdims=True)  # __init__ normalization
    p_pivots = jax.random.normal(k_pp, (Pp, D), dtype=jnp.float32)
    n_pivots = jax.random.normal(k_pn, (Pn, D), dtype=jnp.float32)
    pivot_std = jax.random.normal(k_std, (J, Pp + Pn), dtype=jnp.float32)  # train_std=True
    score_weight = jnp.ones((J, Pp + Pn), dtype=jnp.float32)               # init ones

    # init_phase2 buffers: max |proj_point - proj_pivot| over the init data
    proj_x_i = rbf_proj_ref(vectors, x, GAMMA)
    proj_pp_i = rbf_proj_ref(vectors, p_pivots, GAMMA)
    proj_pn_i = rbf_proj_ref(vectors, n_pivots, GAMMA)
    max_proj_diff_p = jnp.max(jnp.abs(proj_x_i[:, None, :] - proj_pp_i[:, :, None]), axis=2)
    max_proj_diff_n = jnp.max(jnp.abs(proj_x_i[:, None, :] - proj_pn_i[:, :, None]), axis=2)

    # Pallas forward
    score = tv7_forward(x, vectors, p_pivots, n_pivots, pivot_std, score_weight,
                        max_proj_diff_p, max_proj_diff_n)
    score = jax.block_until_ready(score)

    # Pure-JAX reference of TV7.forward (direct broadcast formulation)
    p_ref = branch_score_ref(proj_x_i, proj_pp_i, max_proj_diff_p,
                             pivot_std[:, :Pp], score_weight[:, :Pp])
    n_ref = branch_score_ref(proj_x_i, proj_pn_i, max_proj_diff_n,
                             pivot_std[:, Pp:], score_weight[:, Pp:])
    ref = (1.0 + p_ref - n_ref) / 2.0

    assert score.shape == (N,)
    err = jnp.max(jnp.abs(score - ref))
    # tolerance is slightly looser than before: the MXU distance reformulation and
    # the folded reciprocal shift numerics at the ~1e-6 level.
    assert jnp.allclose(score, ref, atol=1e-4, rtol=1e-4), f"max abs err {err}"
    print("KERNEL_OK")
</pallas_src>

<mosaic_0001>
module attributes {stable_mosaic.version = 11 : i64} {
  func.func @tv7_kernel(%arg0: i32, %arg1: memref<32x512xf32, #tpu.memory_space<vmem>>, %arg2: memref<8x32xf32, #tpu.memory_space<vmem>>, %arg3: memref<128x8xf32, #tpu.memory_space<vmem>>, %arg4: memref<128x1xf32, #tpu.memory_space<vmem>>, %arg5: memref<128x1xf32, #tpu.memory_space<vmem>>, %arg6: memref<8x128xf32, #tpu.memory_space<vmem>>, %arg7: memref<1x512xf32, #tpu.memory_space<vmem>>) attributes {dimension_semantics = [#tpu.dimension_semantics<parallel>], iteration_bounds = array<i64: 2>, scalar_prefetch = 0 : i64, scratch_operands = 0 : i64, tpu.core_type = #tpu.core_type<tc>, window_params = [{transform_indices = @transform_0, window_bounds = array<i64: 32, 512>}, {pipeline_mode = #tpu.pipeline_mode<synchronous>, transform_indices = @transform_1, window_bounds = array<i64: 8, 32>}, {pipeline_mode = #tpu.pipeline_mode<synchronous>, transform_indices = @transform_2, window_bounds = array<i64: 128, 8>}, {pipeline_mode = #tpu.pipeline_mode<synchronous>, transform_indices = @transform_3, window_bounds = array<i64: 128, 1>}, {pipeline_mode = #tpu.pipeline_mode<synchronous>, transform_indices = @transform_4, window_bounds = array<i64: 128, 1>}, {pipeline_mode = #tpu.pipeline_mode<synchronous>, transform_indices = @transform_5, window_bounds = array<i64: 8, 128>}, {transform_indices = @transform_6, window_bounds = array<i64: 1, 512>}]} {
    %c0 = arith.constant 0 : index
    %c0_0 = arith.constant 0 : index
    %0 = vector.load %arg1[%c0, %c0_0] : memref<32x512xf32, #tpu.memory_space<vmem>>, vector<32x512xf32>
    %c0_1 = arith.constant 0 : index
    %c0_2 = arith.constant 0 : index
    %1 = vector.load %arg2[%c0_1, %c0_2] : memref<8x32xf32, #tpu.memory_space<vmem>>, vector<8x32xf32>
    %cst = arith.constant dense<0.000000e+00> : vector<8x512xf32>
    %2 = tpu.matmul %1, %0, %cst {dimension_numbers = #tpu.dot_dimension_numbers<[1], [0], [0], [1], [0, 0, 1, 1], [], []>} : vector<8x32xf32>, vector<32x512xf32>, vector<8x512xf32> -> vector<8x512xf32>
    %3 = arith.mulf %0, %0 : vector<32x512xf32>
    %cst_3 = arith.constant dense<0.000000e+00> : vector<512xf32>
    %4 = vector.multi_reduction <add>, %3, %cst_3 [0] : vector<32x512xf32> to vector<512xf32>
    %5 = vector.shape_cast %4 : vector<512xf32> to vector<1x512xf32>
    %cst_4 = arith.constant 1.000000e+00 : f32
    %6 = vector.broadcast %cst_4 : f32 to vector<1x512xf32>
    %7 = arith.addf %6, %5 : vector<1x512xf32>
    %cst_5 = arith.constant 2.000000e+00 : f32
    %8 = vector.broadcast %cst_5 : f32 to vector<8x512xf32>
    %9 = arith.mulf %8, %2 : vector<8x512xf32>
    %10 = vector.broadcast %7 : vector<1x512xf32> to vector<8x512xf32>
    %11 = arith.subf %10, %9 : vector<8x512xf32>
    %cst_6 = arith.constant 0.000000e+00 : f32
    %12 = vector.broadcast %cst_6 : f32 to vector<8x512xf32>
    %13 = arith.maximumf %11, %12 : vector<8x512xf32>
    %cst_7 = arith.constant -1.000000e+00 : f32
    %14 = vector.broadcast %cst_7 : f32 to vector<8x512xf32>
    %15 = arith.mulf %14, %13 : vector<8x512xf32>
    %16 = math.exp %15 : vector<8x512xf32>
    %c0_8 = arith.constant 0 : index
    %c0_9 = arith.constant 0 : index
    %17 = vector.load %arg3[%c0_8, %c0_9] : memref<128x8xf32, #tpu.memory_space<vmem>>, vector<128x8xf32>
    %cst_10 = arith.constant dense<0.000000e+00> : vector<128x512xf32>
    %18 = tpu.matmul %17, %16, %cst_10 {dimension_numbers = #tpu.dot_dimension_numbers<[1], [0], [0], [1], [0, 0, 1, 1], [], []>} : vector<128x8xf32>, vector<8x512xf32>, vector<128x512xf32> -> vector<128x512xf32>
    %c0_11 = arith.constant 0 : index
    %c0_12 = arith.constant 0 : index
    %19 = vector.load %arg4[%c0_11, %c0_12] : memref<128x1xf32, #tpu.memory_space<vmem>>, vector<128x1xf32>
    %20 = vector.broadcast %19 : vector<128x1xf32> to vector<128x512xf32>
    %21 = arith.subf %18, %20 : vector<128x512xf32>
    %22 = math.absf %21 : vector<128x512xf32>
    %c0_13 = arith.constant 0 : index
    %c0_14 = arith.constant 0 : index
    %23 = vector.load %arg5[%c0_13, %c0_14] : memref<128x1xf32, #tpu.memory_space<vmem>>, vector<128x1xf32>
    %24 = vector.broadcast %23 : vector<128x1xf32> to vector<128x512xf32>
    %25 = arith.mulf %22, %24 : vector<128x512xf32>
    %cst_15 = arith.constant 1.000000e+00 : f32
    %26 = vector.broadcast %cst_15 : f32 to vector<128x512xf32>
    %27 = arith.subf %26, %25 : vector<128x512xf32>
    %cst_16 = arith.constant 0.000000e+00 : f32
    %28 = vector.broadcast %cst_16 : f32 to vector<128x512xf32>
    %29 = arith.maximumf %27, %28 : vector<128x512xf32>
    %c0_17 = arith.constant 0 : index
    %c0_18 = arith.constant 0 : index
    %30 = vector.load %arg6[%c0_17, %c0_18] : memref<8x128xf32, #tpu.memory_space<vmem>>, vector<8x128xf32>
    %cst_19 = arith.constant dense<0.000000e+00> : vector<8x512xf32>
    %31 = tpu.matmul %30, %29, %cst_19 {dimension_numbers = #tpu.dot_dimension_numbers<[1], [0], [0], [1], [0, 0, 1, 1], [], []>} : vector<8x128xf32>, vector<128x512xf32>, vector<8x512xf32> -> vector<8x512xf32>
    %32 = vector.extract_strided_slice %31 {offsets = [0, 0], sizes = [1, 512], strides = [1, 1]} : vector<8x512xf32> to vector<1x512xf32>
    %cst_20 = arith.constant 5.000000e-01 : f32
    %33 = vector.broadcast %cst_20 : f32 to vector<1x512xf32>
    %34 = arith.mulf %33, %32 : vector<1x512xf32>
    %cst_21 = arith.constant 5.000000e-01 : f32
    %35 = vector.broadcast %cst_21 : f32 to vector<1x512xf32>
    %36 = arith.addf %35, %34 : vector<1x512xf32>
    %c0_22 = arith.constant 0 : index
    %c0_23 = arith.constant 0 : index
    %37 = vector.load %arg7[%c0_22, %c0_23] : memref<1x512xf32, #tpu.memory_space<vmem>>, vector<1x512xf32>
    tpu.vector_store %arg7[%c0_22, %c0_23], %36 {strides = array<i32>} : memref<1x512xf32, #tpu.memory_space<vmem>>, vector<1x512xf32>,
    return
  }
  func.func @transform_0(%arg0: i32) -> (i32, i32) {
    %c0_i32 = arith.constant 0 : i32
    %c0_i32_0 = arith.constant 0 : i32
    return %c0_i32, %arg0 : i32, i32
  }
  func.func @transform_1(%arg0: i32) -> (i32, i32) {
    %c0_i32 = arith.constant 0 : i32
    %c0_i32_0 = arith.constant 0 : i32
    %c0_i32_1 = arith.constant 0 : i32
    return %c0_i32, %c0_i32_0 : i32, i32
  }
  func.func @transform_2(%arg0: i32) -> (i32, i32) {
    %c0_i32 = arith.constant 0 : i32
    %c0_i32_0 = arith.constant 0 : i32
    %c0_i32_1 = arith.constant 0 : i32
    return %c0_i32, %c0_i32_0 : i32, i32
  }
  func.func @transform_3(%arg0: i32) -> (i32, i32) {
    %c0_i32 = arith.constant 0 : i32
    %c0_i32_0 = arith.constant 0 : i32
    %c0_i32_1 = arith.constant 0 : i32
    return %c0_i32, %c0_i32_0 : i32, i32
  }
  func.func @transform_4(%arg0: i32) -> (i32, i32) {
    %c0_i32 = arith.constant 0 : i32
    %c0_i32_0 = arith.constant 0 : i32
    %c0_i32_1 = arith.constant 0 : i32
    return %c0_i32, %c0_i32_0 : i32, i32
  }
  func.func @transform_5(%arg0: i32) -> (i32, i32) {
    %c0_i32 = arith.constant 0 : i32
    %c0_i32_0 = arith.constant 0 : i32
    %c0_i32_1 = arith.constant 0 : i32
    return %c0_i32, %c0_i32_0 : i32, i32
  }
  func.func @transform_6(%arg0: i32) -> (i32, i32) {
    %c0_i32 = arith.constant 0 : i32
    %c0_i32_0 = arith.constant 0 : i32
    return %c0_i32, %arg0 : i32, i32
  }
}

</mosaic_0001>

<llo_original>
// kernel: tpu_custom_call.1
$region0: #{tpu_custom_call.1}
  #allocation0 [shape = 'u32[]', space=smem, size = 0x4, offset = 0x4, fixed_abs, tag = 'smem constant byte address 0x4 - core index']
  #allocation1 [shape = 'u32[72,128]{1,0:T(1,128)}', space=vmem, size = 0x9000, scoped, tag = 'internal scratch']
  %s0 = inlined_call_operand.vmem [shape: f32[32,1024], index: 0, kind: input, shape index: {}]
  %s1 = inlined_call_operand.vmem [shape: f32[8,32], index: 1, kind: input, shape index: {}]
  %s2 = inlined_call_operand.vmem [shape: f32[128,8], index: 2, kind: input, shape index: {}]
  %s3 = inlined_call_operand.vmem [shape: f32[128,1], index: 3, kind: input, shape index: {}]
  %s4 = inlined_call_operand.vmem [shape: f32[128,1], index: 4, kind: input, shape index: {}]
  %s5 = inlined_call_operand.vmem [shape: f32[8,128], index: 5, kind: input, shape index: {}]
  %s6 = inlined_call_operand.hbm [shape: f32[1,1024], index: 6, kind: output, shape index: {}]
  %s7 = sld [smem:[#allocation0]]
  $region80: #{tpu_custom_call.1} parent=0
    _
  %s9 = ssub.s32 1, %s7
  %s10 = scalar_select 0, %s9, %s7
  $region1: #{tpu_custom_call.1} parent=0
    #allocation2 [shape = 'u8[131072]{0}', space=vmem, size = 0x20000, scoped, tag = 'input window, operand 0']
    #allocation3 [shape = 'u8[4096]{0}', space=vmem, size = 0x1000, scoped, tag = 'output window, operand 0']
    #allocation4 [shape = 's32[2]{0}', space=sflag, size = 0x8, scoped, tag = 'scoped memory for tpu_custom_call.1']
    %11 = vsyncpa [#allocation4], 0
    %s12 = scalar_lea.sflag [#allocation4], 1
    %13 = vsyncpa %s12, 0
    loop: start=0, step=1, limit=4
    $region2: #{tpu_custom_call.1} parent=1 // loop_pre_header
      _
    $region3: #{tpu_custom_call.1} parent=1 // loop_header
      %s15 = sphi 0, %s19
      %p16 = scmp.ge.s32.totalorder %s15, 4
      %s25 = sphi 0, %s27
      %s28 = sphi 0, %s25
      %s29 = sphi 0, %s28
      %s45 = sphi 0, %s29
      %s49 = sphi 0, %s49
      %s51 = sphi 0, %s49
      %s52 = sphi 0, %s51
      %s66 = sphi 0, %s52
      %s70 = sphi 0, %s70
      %s72 = sphi 0, %s70
      %s73 = sphi 0, %s72
      %s87 = sphi 0, %s73
      %s91 = sphi 0, %s91
      %s93 = sphi 0, %s91
      %s94 = sphi 0, %s93
      %s108 = sphi 0, %s94
      %s112 = sphi 0, %s112
      %s114 = sphi 0, %s112
      %s115 = sphi 0, %s114
      %s129 = sphi 0, %s115
      %s133 = sphi 0, %s133
      %s135 = sphi 0, %s133
      %s136 = sphi 0, %s135
      %s150 = sphi 0, %s136
      %s156 = sphi 0, %s158
      %s159 = sphi 0, %s156
      %s160 = sphi 0, %s159
      %s176 = sphi 0, %s160
    $region4: #{tpu_custom_call.1} parent=1 // loop_header_branch
      %18 = sbr.rel (%p16) target = $region8
    $region5: #{tpu_custom_call.1} parent=1 // loop_body
      %s20 = ssub.s32 %s15, 1
      %s21 = ssub.s32 %s15, 2
      %s22 = sadd.s32 %s15, 1
      %s23 = ssub.s32 %s15, %s22
      %p24 = scmp.eq.s32.totalorder %s23, 0
      %s26 = sadd.s32 %s25, 1
      %s27 = scalar_select %p24, %s25, %s26
      %p30 = pneg %p24
      %p31 = scmp.eq.s32.totalorder %s15, 1
      %p32 = por %p30, %p31
      %p33 = scmp.ne.s32.totalorder %s25, %s28
      %p34 = scmp.eq.s32.totalorder %s15, 0
      %p35 = por %p33, %p34
      %p36 = scmp.ne.s32.totalorder %s25, %s28
      %p37 = scmp.eq.s32.totalorder %s20, 1
      %p38 = por %p36, %p37
      %p39 = scmp.ne.s32.totalorder %s28, %s29
      %p40 = scmp.eq.s32.totalorder %s20, 0
      %p41 = por %p39, %p40
      %p42 = scmp.ne.s32.totalorder %s28, %s29
      %p43 = scmp.eq.s32.totalorder %s21, 1
      %p44 = por %p42, %p43
      %p46 = scmp.ne.s32.totalorder %s29, %s45
      %p47 = scmp.eq.s32.totalorder %s21, 0
      %p48 = por %p46, %p47
      %s50 = sadd.s32 %s49, 1
      %p53 = scmp.eq.s32.totalorder %s15, 1
      %p54 = scmp.ne.s32.totalorder %s49, %s51
      %p55 = scmp.eq.s32.totalorder %s15, 0
      %p56 = por %p54, %p55
      %p57 = scmp.ne.s32.totalorder %s49, %s51
      %p58 = scmp.eq.s32.totalorder %s20, 1
      %p59 = por %p57, %p58
      %p60 = scmp.ne.s32.totalorder %s51, %s52
      %p61 = scmp.eq.s32.totalorder %s20, 0
      %p62 = por %p60, %p61
      %p63 = scmp.ne.s32.totalorder %s51, %s52
      %p64 = scmp.eq.s32.totalorder %s21, 1
      %p65 = por %p63, %p64
      %p67 = scmp.ne.s32.totalorder %s52, %s66
      %p68 = scmp.eq.s32.totalorder %s21, 0
      %p69 = por %p67, %p68
      %s71 = sadd.s32 %s70, 1
      %p74 = scmp.eq.s32.totalorder %s15, 1
      %p75 = scmp.ne.s32.totalorder %s70, %s72
      %p76 = scmp.eq.s32.totalorder %s15, 0
      %p77 = por %p75, %p76
      %p78 = scmp.ne.s32.totalorder %s70, %s72
      %p79 = scmp.eq.s32.totalorder %s20, 1
      %p80 = por %p78, %p79
      %p81 = scmp.ne.s32.totalorder %s72, %s73
      %p82 = scmp.eq.s32.totalorder %s20, 0
      %p83 = por %p81, %p82
      %p84 = scmp.ne.s32.totalorder %s72, %s73
      %p85 = scmp.eq.s32.totalorder %s21, 1
      %p86 = por %p84, %p85
      %p88 = scmp.ne.s32.totalorder %s73, %s87
      %p89 = scmp.eq.s32.totalorder %s21, 0
      %p90 = por %p88, %p89
      %s92 = sadd.s32 %s91, 1
      %p95 = scmp.eq.s32.totalorder %s15, 1
      %p96 = scmp.ne.s32.totalorder %s91, %s93
      %p97 = scmp.eq.s32.totalorder %s15, 0
      %p98 = por %p96, %p97
      %p99 = scmp.ne.s32.totalorder %s91, %s93
      %p100 = scmp.eq.s32.totalorder %s20, 1
      %p101 = por %p99, %p100
      %p102 = scmp.ne.s32.totalorder %s93, %s94
      %p103 = scmp.eq.s32.totalorder %s20, 0
      %p104 = por %p102, %p103
      %p105 = scmp.ne.s32.totalorder %s93, %s94
      %p106 = scmp.eq.s32.totalorder %s21, 1
      %p107 = por %p105, %p106
      %p109 = scmp.ne.s32.totalorder %s94, %s108
      %p110 = scmp.eq.s32.totalorder %s21, 0
      %p111 = por %p109, %p110
      %s113 = sadd.s32 %s112, 1
      %p116 = scmp.eq.s32.totalorder %s15, 1
      %p117 = scmp.ne.s32.totalorder %s112, %s114
      %p118 = scmp.eq.s32.totalorder %s15, 0
      %p119 = por %p117, %p118
      %p120 = scmp.ne.s32.totalorder %s112, %s114
      %p121 = scmp.eq.s32.totalorder %s20, 1
      %p122 = por %p120, %p121
      %p123 = scmp.ne.s32.totalorder %s114, %s115
      %p124 = scmp.eq.s32.totalorder %s20, 0
      %p125 = por %p123, %p124
      %p126 = scmp.ne.s32.totalorder %s114, %s115
      %p127 = scmp.eq.s32.totalorder %s21, 1
      %p128 = por %p126, %p127
      %p130 = scmp.ne.s32.totalorder %s115, %s129
      %p131 = scmp.eq.s32.totalorder %s21, 0
      %p132 = por %p130, %p131
      %s134 = sadd.s32 %s133, 1
      %p137 = scmp.eq.s32.totalorder %s15, 1
      %p138 = scmp.ne.s32.totalorder %s133, %s135
      %p139 = scmp.eq.s32.totalorder %s15, 0
      %p140 = por %p138, %p139
      %p141 = scmp.ne.s32.totalorder %s133, %s135
      %p142 = scmp.eq.s32.totalorder %s20, 1
      %p143 = por %p141, %p142
      %p144 = scmp.ne.s32.totalorder %s135, %s136
      %p145 = scmp.eq.s32.totalorder %s20, 0
      %p146 = por %p144, %p145
      %p147 = scmp.ne.s32.totalorder %s135, %s136
      %p148 = scmp.eq.s32.totalorder %s21, 1
      %p149 = por %p147, %p148
      %p151 = scmp.ne.s32.totalorder %s136, %s150
      %p152 = scmp.eq.s32.totalorder %s21, 0
      %p153 = por %p151, %p152
      %s154 = ssub.s32 %s15, %s22
      %p155 = scmp.eq.s32.totalorder %s154, 0
      %s157 = sadd.s32 %s156, 1
      %s158 = scalar_select %p155, %s156, %s157
      %p161 = pneg %p155
      %p162 = scmp.eq.s32.totalorder %s15, 1
      %p163 = por %p161, %p162
      %p164 = scmp.ne.s32.totalorder %s156, %s159
      %p165 = scmp.eq.s32.totalorder %s15, 0
      %p166 = por %p164, %p165
      %p167 = scmp.ne.s32.totalorder %s156, %s159
      %p168 = scmp.eq.s32.totalorder %s20, 1
      %p169 = por %p167, %p168
      %p170 = scmp.ne.s32.totalorder %s159, %s160
      %p171 = scmp.eq.s32.totalorder %s20, 0
      %p172 = por %p170, %p171
      %p173 = scmp.ne.s32.totalorder %s159, %s160
      %p174 = scmp.eq.s32.totalorder %s21, 1
      %p175 = por %p173, %p174
      %p177 = scmp.ne.s32.totalorder %s160, %s176
      %p178 = scmp.eq.s32.totalorder %s21, 0
      %p179 = por %p177, %p178
      %p180 = scmp.le.s32.totalorder 1, %s15
      %p181 = scmp.lt.s32.totalorder %s15, 3
      %p182 = pnand %p180, %p181
      %p183 = pneg %p182
      // Predicated region
      $region9: #{tpu_custom_call.1} parent=5 // pred_check
        _
      $region10: #{tpu_custom_call.1} parent=5 // pred_check_branch
        %185 = sbr.rel (%p182) target = $region12
      $region11: #{tpu_custom_call.1} parent=5 // pred_region
        %s186 = ssub.s32 %s15, 1
        // Predicated region
        $region13: #{tpu_custom_call.1} parent=11 // pred_check
          %p187 = pneg %p62
        $region14: #{tpu_custom_call.1} parent=11 // pred_check_branch
          %189 = sbr.rel (%p187) target = $region16
        $region15: #{tpu_custom_call.1} parent=11 // pred_region
          _
        $region16: #{tpu_custom_call.1} parent=11 // pred_fallthru
          _
        // Predicated region
        $region17: #{tpu_custom_call.1} parent=11 // pred_check
          %p190 = pneg %p83
        $region18: #{tpu_custom_call.1} parent=11 // pred_check_branch
          %192 = sbr.rel (%p190) target = $region20
        $region19: #{tpu_custom_call.1} parent=11 // pred_region
          _
        $region20: #{tpu_custom_call.1} parent=11 // pred_fallthru
          _
        // Predicated region
        $region21: #{tpu_custom_call.1} parent=11 // pred_check
          %p193 = pneg %p104
        $region22: #{tpu_custom_call.1} parent=11 // pred_check_branch
          %195 = sbr.rel (%p193) target = $region24
        $region23: #{tpu_custom_call.1} parent=11 // pred_region
          _
        $region24: #{tpu_custom_call.1} parent=11 // pred_fallthru
          _
        // Predicated region
        $region25: #{tpu_custom_call.1} parent=11 // pred_check
          %p196 = pneg %p125
        $region26: #{tpu_custom_call.1} parent=11 // pred_check_branch
          %198 = sbr.rel (%p196) target = $region28
        $region27: #{tpu_custom_call.1} parent=11 // pred_region
          _
        $region28: #{tpu_custom_call.1} parent=11 // pred_fallthru
          _
        // Predicated region
        $region29: #{tpu_custom_call.1} parent=11 // pred_check
          %p199 = pneg %p146
        $region30: #{tpu_custom_call.1} parent=11 // pred_check_branch
          %201 = sbr.rel (%p199) target = $region32
        $region31: #{tpu_custom_call.1} parent=11 // pred_region
          _
        $region32: #{tpu_custom_call.1} parent=11 // pred_fallthru
          _
      $region12: #{tpu_custom_call.1} parent=5 // pred_fallthru
        _
      %p202 = scmp.lt.s32.totalorder %s15, 2
      // Predicated region
      $region33: #{tpu_custom_call.1} parent=5 // pred_check
        %p203 = pneg %p202
      $region34: #{tpu_custom_call.1} parent=5 // pred_check_branch
        %205 = sbr.rel (%p203) target = $region36
      $region35: #{tpu_custom_call.1} parent=5 // pred_region
        // Predicated region
        $region37: #{tpu_custom_call.1} parent=35 // pred_check
          %p206 = pneg %p35
        $region38: #{tpu_custom_call.1} parent=35 // pred_check_branch
          %208 = sbr.rel (%p206) target = $region40
        $region39: #{tpu_custom_call.1} parent=35 // pred_region
          %s209 = sand.u32 %s25, 1
          %s210 = sand.u32 %s25, 1
          %s211 = smul.addr %s210, 128
          %s212 = scalar_lea.vmem [#allocation2], %s211
          %s213 = smul.u32 4, %s15
          %s214 = smul.addr %s213, 8
          %s215 = scalar_lea.vmem %s0, %s214
          // Predicated region
          $region41: #{tpu_custom_call.1} parent=39 // pred_check
            _
          $region42: #{tpu_custom_call.1} parent=39 // pred_check_branch
            %217 = sbr.rel (0) target = $region44
          $region43: #{tpu_custom_call.1} parent=39 // pred_region
            // Predicated region
            $region45: #{tpu_custom_call.1} parent=43 // pred_check
              _
            $region46: #{tpu_custom_call.1} parent=43 // pred_check_branch
              %219 = sbr.rel (0) target = $region48
            $region47: #{tpu_custom_call.1} parent=43 // pred_region
              loop: start=0, step=1, limit=1
              $region49: #{tpu_custom_call.1} parent=47 // loop_pre_header
                _
              $region50: #{tpu_custom_call.1} parent=47 // loop_header
                %s221 = sphi 0, %s225
                %p222 = scmp.ge.s32.totalorder %s221, 1
                %s226 = sphi %s215, %s215
                %s227 = sphi %s212, %s212
              $region51: #{tpu_custom_call.1} parent=47 // loop_header_branch
                %224 = sbr.rel (%p222) target = $region55
              $region52: #{tpu_custom_call.1} parent=47 // loop_body
                %v228 = vld [vmem:[%s226] sm:$0xff]
                %229 = vst [vmem:[%s227] sm:$0xff] %v228
                %v230 = vld [vmem:[%s226 + $0x8] sm:$0xff]
                %231 = vst [vmem:[%s227 + $0x8] sm:$0xff] %v230
                %v232 = vld [vmem:[%s226 + $0x10] sm:$0xff]
                %233 = vst [vmem:[%s227 + $0x10] sm:$0xff] %v232
                %v234 = vld [vmem:[%s226 + $0x18] sm:$0xff]
                %235 = vst [vmem:[%s227 + $0x18] sm:$0xff] %v234
                %v236 = vld [vmem:[%s226 + $0x40] sm:$0xff]
                %237 = vst [vmem:[%s227 + $0x20] sm:$0xff] %v236
                %v238 = vld [vmem:[%s226 + $0x48] sm:$0xff]
                %239 = vst [vmem:[%s227 + $0x28] sm:$0xff] %v238
                %v240 = vld [vmem:[%s226 + $0x50] sm:$0xff]
                %241 = vst [vmem:[%s227 + $0x30] sm:$0xff] %v240
                %v242 = vld [vmem:[%s226 + $0x58] sm:$0xff]
                %243 = vst [vmem:[%s227 + $0x38] sm:$0xff] %v242
                %v244 = vld [vmem:[%s226 + $0x80] sm:$0xff]
                %245 = vst [vmem:[%s227 + $0x40] sm:$0xff] %v244
                %v246 = vld [vmem:[%s226 + $0x88] sm:$0xff]
                %247 = vst [vmem:[%s227 + $0x48] sm:$0xff] %v246
                %v248 = vld [vmem:[%s226 + $0x90] sm:$0xff]
                %249 = vst [vmem:[%s227 + $0x50] sm:$0xff] %v248
                %v250 = vld [vmem:[%s226 + $0x98] sm:$0xff]
                %251 = vst [vmem:[%s227 + $0x58] sm:$0xff] %v250
                %v252 = vld [vmem:[%s226 + $0xc0] sm:$0xff]
                %253 = vst [vmem:[%s227 + $0x60] sm:$0xff] %v252
                %v254 = vld [vmem:[%s226 + $0xc8] sm:$0xff]
                %255 = vst [vmem:[%s227 + $0x68] sm:$0xff] %v254
                %v256 = vld [vmem:[%s226 + $0xd0] sm:$0xff]
                %257 = vst [vmem:[%s227 + $0x70] sm:$0xff] %v256
                %v258 = vld [vmem:[%s226 + $0xd8] sm:$0xff]
                %259 = vst [vmem:[%s227 + $0x78] sm:$0xff] %v258
              $region53: #{tpu_custom_call.1} parent=47 // loop_footer
                %s225 = sadd.s32 1, %s221
              $region54: #{tpu_custom_call.1} parent=47 // loop_footer_branch
                %220 = sbr.rel target = $region50
              $region55: #{tpu_custom_call.1} parent=47 // loop_exit
                _
            $region48: #{tpu_custom_call.1} parent=43 // pred_fallthru
              _
            // Predicated region
            $region56: #{tpu_custom_call.1} parent=43 // pred_check
              _
            $region57: #{tpu_custom_call.1} parent=43 // pred_check_branch
              %261 = sbr.rel target = $region59
            $region58: #{tpu_custom_call.1} parent=43 // pred_region
              _
            $region59: #{tpu_custom_call.1} parent=43 // pred_fallthru
              _
          $region44: #{tpu_custom_call.1} parent=39 // pred_fallthru
            _
          %262 = vnop
        $region40: #{tpu_custom_call.1} parent=35 // pred_fallthru
          _
      $region36: #{tpu_custom_call.1} parent=5 // pred_fallthru
        _
      %p263 = scmp.le.s32.totalorder 1, %s15
      %p264 = scmp.lt.s32.totalorder %s15, 3
      %p265 = pnand %p263, %p264
      %p266 = pneg %p265
      // Predicated region
      $region60: #{tpu_custom_call.1} parent=5 // pred_check
        _
      $region61: #{tpu_custom_call.1} parent=5 // pred_check_branch
        %268 = sbr.rel (%p265) target = $region63
      $region62: #{tpu_custom_call.1} parent=5 // pred_region
        %s269 = ssub.s32 %s15, 1
        %s270 = sand.u32 %s28, 1
        %s271 = sand.u32 %s28, 1
        %s272 = smul.addr %s271, 128
        %s273 = scalar_lea.vmem [#allocation2], %s272
        // Predicated region
        $region64: #{tpu_custom_call.1} parent=62 // pred_check
          %p274 = pneg %p41
        $region65: #{tpu_custom_call.1} parent=62 // pred_check_branch
          %276 = sbr.rel (%p274) target = $region67
        $region66: #{tpu_custom_call.1} parent=62 // pred_region
          _
        $region67: #{tpu_custom_call.1} parent=62 // pred_fallthru
          _
        %s277 = sand.u32 %s28, 1
        %s278 = sand.u32 %s28, 1
        %s279 = smul.addr %s278, 128
        %s280 = scalar_lea.vmem [#allocation2], %s279
        %p281 = pneg %p41
        %p282 = pneg %p38
        %p283 = pneg %p62
        %p284 = pneg %p59
        %p285 = pneg %p83
        %p286 = pneg %p80
        %p287 = pneg %p104
        %p288 = pneg %p101
        %p289 = pneg %p125
        %p290 = pneg %p122
        %p291 = pneg %p146
        %p292 = pneg %p143
        %p293 = pneg %p172
        %p294 = pneg %p169
        %s295 = sand.u32 %s159, 1
        %s296 = scalar_lea.sflag [#allocation4], %s295
        %s297 = sand.u32 %s159, 1
        %s298 = smul.addr %s297, 4
        %s299 = scalar_lea.vmem [#allocation3], %s298
        %s300 = smul.u32 4, %s20
        %s301 = smul.u32 4, %s20
        %v302 = vld [vmem:[%s273] sm:$0xff]
        %v303 = vld [vmem:[%s273 + $0x8] sm:$0xff]
        %v304 = vld [vmem:[%s273 + $0x10] sm:$0xff]
        %v305 = vld [vmem:[%s273 + $0x18] sm:$0xff]
        %v306 = vld [vmem:[%s273 + $0x20] sm:$0xff]
        %v307 = vld [vmem:[%s273 + $0x28] sm:$0xff]
        %v308 = vld [vmem:[%s273 + $0x30] sm:$0xff]
        %v309 = vld [vmem:[%s273 + $0x38] sm:$0xff]
        %v310 = vld [vmem:[%s273 + $0x40] sm:$0xff]
        %v311 = vld [vmem:[%s273 + $0x48] sm:$0xff]
        %v312 = vld [vmem:[%s273 + $0x50] sm:$0xff]
        %v313 = vld [vmem:[%s273 + $0x58] sm:$0xff]
        %v314 = vld [vmem:[%s273 + $0x60] sm:$0xff]
        %v315 = vld [vmem:[%s273 + $0x68] sm:$0xff]
        %v316 = vld [vmem:[%s273 + $0x70] sm:$0xff]
        %v317 = vld [vmem:[%s273 + $0x78] sm:$0xff]
        %v318 = vld [vmem:[%s1] sm:$0xff]
        %vm319 = vcmask 261120
        %v321 = vsel %vm319, %v318, 0
        %323 = vmatpush.msra.mxu0 0.0
        %324 = vmatpush.msra.mxu0 0.0
        %325 = vmatpush.msra.mxu0 0.0
        %326 = vmatpush.msra.mxu0 0.0
        %327 = vmatpush.msra.mxu0 0.0
        %328 = vmatpush.msra.mxu0 0.0
        %329 = vmatpush.msra.mxu0 0.0
        %330 = vmatpush.msra.mxu0 0.0
        %331 = vmatpush.msra.mxu0 0.0
        %332 = vmatpush.msra.mxu0 0.0
        %333 = vmatpush.msra.mxu0 0.0
        %334 = vmatpush.msra.mxu0 0.0
        %335 = vmatpush.msra.mxu0 %v314
        %336 = vmatpush.msra.mxu0 %v310
        %337 = vmatpush.msra.mxu0 %v306
        %338 = vmatpush.msra.mxu0 %v302
        %339 = vmatmul.f32.gmra.mxu0 %v321
        %v340 = vpop.f32.mrf.mxu0
        %v341 = vadd.f32 0.0, %v340
        %342 = vdwg.mxu0
        %343 = vmatpush.msra.mxu0 0.0
        %344 = vmatpush.msra.mxu0 0.0
        %345 = vmatpush.msra.mxu0 0.0
        %346 = vmatpush.msra.mxu0 0.0
        %347 = vmatpush.msra.mxu0 0.0
        %348 = vmatpush.msra.mxu0 0.0
        %349 = vmatpush.msra.mxu0 0.0
        %350 = vmatpush.msra.mxu0 0.0
        %351 = vmatpush.msra.mxu0 0.0
        %352 = vmatpush.msra.mxu0 0.0
        %353 = vmatpush.msra.mxu0 0.0
        %354 = vmatpush.msra.mxu0 0.0
        %355 = vmatpush.msra.mxu0 %v315
        %356 = vmatpush.msra.mxu0 %v311
        %357 = vmatpush.msra.mxu0 %v307
        %358 = vmatpush.msra.mxu0 %v303
        %359 = vmatmul.f32.gmra.mxu0 %v321
        %v360 = vpop.f32.mrf.mxu0
        %v361 = vadd.f32 0.0, %v360
        %362 = vdwg.mxu0
        %363 = vmatpush.msra.mxu0 0.0
        %364 = vmatpush.msra.mxu0 0.0
        %365 = vmatpush.msra.mxu0 0.0
        %366 = vmatpush.msra.mxu0 0.0
        %367 = vmatpush.msra.mxu0 0.0
        %368 = vmatpush.msra.mxu0 0.0
        %369 = vmatpush.msra.mxu0 0.0
        %370 = vmatpush.msra.mxu0 0.0
        %371 = vmatpush.msra.mxu0 0.0
        %372 = vmatpush.msra.mxu0 0.0
        %373 = vmatpush.msra.mxu0 0.0
        %374 = vmatpush.msra.mxu0 0.0
        %375 = vmatpush.msra.mxu0 %v316
        %376 = vmatpush.msra.mxu0 %v312
        %377 = vmatpush.msra.mxu0 %v308
        %378 = vmatpush.msra.mxu0 %v304
        %379 = vmatmul.f32.gmra.mxu0 %v321
        %v380 = vpop.f32.mrf.mxu0
        %v381 = vadd.f32 0.0, %v380
        %382 = vdwg.mxu0
        %383 = vmatpush.msra.mxu0 0.0
        %384 = vmatpush.msra.mxu0 0.0
        %385 = vmatpush.msra.mxu0 0.0
        %386 = vmatpush.msra.mxu0 0.0
        %387 = vmatpush.msra.mxu0 0.0
        %388 = vmatpush.msra.mxu0 0.0
        %389 = vmatpush.msra.mxu0 0.0
        %390 = vmatpush.msra.mxu0 0.0
        %391 = vmatpush.msra.mxu0 0.0
        %392 = vmatpush.msra.mxu0 0.0
        %393 = vmatpush.msra.mxu0 0.0
        %394 = vmatpush.msra.mxu0 0.0
        %395 = vmatpush.msra.mxu0 %v317
        %396 = vmatpush.msra.mxu0 %v313
        %397 = vmatpush.msra.mxu0 %v309
        %398 = vmatpush.msra.mxu0 %v305
        %399 = vmatmul.f32.gmra.mxu0 %v321
        %v400 = vpop.f32.mrf.mxu0
        %v401 = vadd.f32 0.0, %v400
        %402 = vdwg.mxu0
        %v403 = vmul.f32 %v302, %v302
        %v404 = vmul.f32 %v303, %v303
        %v405 = vmul.f32 %v304, %v304
        %v406 = vmul.f32 %v305, %v305
        %v407 = vmul.f32 %v306, %v306
        %v408 = vmul.f32 %v307, %v307
        %v409 = vmul.f32 %v308, %v308
        %v410 = vmul.f32 %v309, %v309
        %v411 = vmul.f32 %v310, %v310
        %v412 = vmul.f32 %v311, %v311
        %v413 = vmul.f32 %v312, %v312
        %v414 = vmul.f32 %v313, %v313
        %v415 = vmul.f32 %v314, %v314
        %v416 = vmul.f32 %v315, %v315
        %v417 = vmul.f32 %v316, %v316
        %v418 = vmul.f32 %v317, %v317
        %v419 = vadd.f32 %v403, %v407
        %v420 = vadd.f32 %v419, %v411
        %v421 = vadd.f32 %v420, %v415
        %v422 = vrot.slane %v421, 4
        %v423 = vadd.f32 %v421, %v422
        %v424 = vrot.slane %v423, 2
        %v425 = vadd.f32 %v423, %v424
        %v426 = vrot.slane %v425, 1
        %v427 = vadd.f32 %v425, %v426
        %v428 = vadd.f32 %v404, %v408
        %v429 = vadd.f32 %v428, %v412
        %v430 = vadd.f32 %v429, %v416
        %v431 = vrot.slane %v430, 4
        %v432 = vadd.f32 %v430, %v431
        %v433 = vrot.slane %v432, 2
        %v434 = vadd.f32 %v432, %v433
        %v435 = vrot.slane %v434, 1
        %v436 = vadd.f32 %v434, %v435
        %v437 = vadd.f32 %v405, %v409
        %v438 = vadd.f32 %v437, %v413
        %v439 = vadd.f32 %v438, %v417
        %v440 = vrot.slane %v439, 4
        %v441 = vadd.f32 %v439, %v440
        %v442 = vrot.slane %v441, 2
        %v443 = vadd.f32 %v441, %v442
        %v444 = vrot.slane %v443, 1
        %v445 = vadd.f32 %v443, %v444
        %v446 = vadd.f32 %v406, %v410
        %v447 = vadd.f32 %v446, %v414
        %v448 = vadd.f32 %v447, %v418
        %v449 = vrot.slane %v448, 4
        %v450 = vadd.f32 %v448, %v449
        %v451 = vrot.slane %v450, 2
        %v452 = vadd.f32 %v450, %v451
        %v453 = vrot.slane %v452, 1
        %v454 = vadd.f32 %v452, %v453
        %v455 = vadd.f32 %v427, 1.0
        %v456 = vadd.f32 %v436, 1.0
        %v457 = vadd.f32 %v445, 1.0
        %v458 = vadd.f32 %v454, 1.0
        %v459 = vmul.f32 %v341, 2.0
        %v460 = vmul.f32 %v361, 2.0
        %v461 = vmul.f32 %v381, 2.0
        %v462 = vmul.f32 %v401, 2.0
        %v463 = vsub.f32 %v455, %v459
        %v464 = vsub.f32 %v456, %v460
        %v465 = vsub.f32 %v457, %v461
        %v466 = vsub.f32 %v458, %v462
        %v467 = vmax.f32 %v463, 0.0
        %v468 = vmax.f32 %v464, 0.0
        %v469 = vmax.f32 %v465, 0.0
        %v470 = vmax.f32 %v466, 0.0
        %v471 = vmul.f32 %v467, -1.0
        %v472 = vmul.f32 %v468, -1.0
        %v473 = vmul.f32 %v469, -1.0
        %v474 = vmul.f32 %v470, -1.0
        %v475 = vmul.f32 %v471, 1.442695
        %v476 = vpow.pop %v475
        %v477 = vmul.f32 %v472, 1.442695
        %v478 = vpow.pop %v477
        %v479 = vmul.f32 %v473, 1.442695
        %v480 = vpow.pop %v479
        %v481 = vmul.f32 %v474, 1.442695
        %v482 = vpow.pop %v481
        %v483 = vld [vmem:[%s2] sm:$0xff]
        %v484 = vld [vmem:[%s2 + $0x8] sm:$0xff]
        %v485 = vld [vmem:[%s2 + $0x10] sm:$0xff]
        %v486 = vld [vmem:[%s2 + $0x18] sm:$0xff]
        %v487 = vld [vmem:[%s2 + $0x20] sm:$0xff]
        %v488 = vld [vmem:[%s2 + $0x28] sm:$0xff]
        %v489 = vld [vmem:[%s2 + $0x30] sm:$0xff]
        %v490 = vld [vmem:[%s2 + $0x38] sm:$0xff]
        %v491 = vld [vmem:[%s2 + $0x40] sm:$0xff]
        %v492 = vld [vmem:[%s2 + $0x48] sm:$0xff]
        %v493 = vld [vmem:[%s2 + $0x50] sm:$0xff]
        %v494 = vld [vmem:[%s2 + $0x58] sm:$0xff]
        %v495 = vld [vmem:[%s2 + $0x60] sm:$0xff]
        %v496 = vld [vmem:[%s2 + $0x68] sm:$0xff]
        %v497 = vld [vmem:[%s2 + $0x70] sm:$0xff]
        %v498 = vld [vmem:[%s2 + $0x78] sm:$0xff]
        %vm499 = vcmask 64512
        %v501 = vsel %vm499, %v483, 0
        %v504 = vsel %vm499, %v484, 0
        %v507 = vsel %vm499, %v485, 0
        %v510 = vsel %vm499, %v486, 0
        %v513 = vsel %vm499, %v487, 0
        %v516 = vsel %vm499, %v488, 0
        %v519 = vsel %vm499, %v489, 0
        %v522 = vsel %vm499, %v490, 0
        %v525 = vsel %vm499, %v491, 0
        %v528 = vsel %vm499, %v492, 0
        %v531 = vsel %vm499, %v493, 0
        %v534 = vsel %vm499, %v494, 0
        %v537 = vsel %vm499, %v495, 0
        %v540 = vsel %vm499, %v496, 0
        %v543 = vsel %vm499, %v497, 0
        %v546 = vsel %vm499, %v498, 0
        %548 = vmatpush.msra.mxu0 0.0
        %549 = vmatpush.msra.mxu0 0.0
        %550 = vmatpush.msra.mxu0 0.0
        %551 = vmatpush.msra.mxu0 0.0
        %552 = vmatpush.msra.mxu0 0.0
        %553 = vmatpush.msra.mxu0 0.0
        %554 = vmatpush.msra.mxu0 0.0
        %555 = vmatpush.msra.mxu0 0.0
        %556 = vmatpush.msra.mxu0 0.0
        %557 = vmatpush.msra.mxu0 0.0
        %558 = vmatpush.msra.mxu0 0.0
        %559 = vmatpush.msra.mxu0 0.0
        %560 = vmatpush.msra.mxu0 0.0
        %561 = vmatpush.msra.mxu0 0.0
        %562 = vmatpush.msra.mxu0 0.0
        %563 = vmatpush.msra.mxu0 %v476
        %564 = vmatmul.f32.gmra.mxu0 %v501
        %v565 = vpop.f32.mrf.mxu0
        %v566 = vadd.f32 0.0, %v565
        %567 = vmatmul.f32.gmra.mxu0 %v504
        %v568 = vpop.f32.mrf.mxu0
        %v569 = vadd.f32 0.0, %v568
        %570 = vmatmul.f32.gmra.mxu0 %v507
        %v571 = vpop.f32.mrf.mxu0
        %v572 = vadd.f32 0.0, %v571
        %573 = vmatmul.f32.gmra.mxu0 %v510
        %v574 = vpop.f32.mrf.mxu0
        %v575 = vadd.f32 0.0, %v574
        %576 = vmatmul.f32.gmra.mxu0 %v513
        %v577 = vpop.f32.mrf.mxu0
        %v578 = vadd.f32 0.0, %v577
        %579 = vmatmul.f32.gmra.mxu0 %v516
        %v580 = vpop.f32.mrf.mxu0
        %v581 = vadd.f32 0.0, %v580
        %582 = vmatmul.f32.gmra.mxu0 %v519
        %v583 = vpop.f32.mrf.mxu0
        %v584 = vadd.f32 0.0, %v583
        %585 = vmatmul.f32.gmra.mxu0 %v522
        %v586 = vpop.f32.mrf.mxu0
        %v587 = vadd.f32 0.0, %v586
        %588 = vmatmul.f32.gmra.mxu0 %v525
        %v589 = vpop.f32.mrf.mxu0
        %v590 = vadd.f32 0.0, %v589
        %591 = vmatmul.f32.gmra.mxu0 %v528
        %v592 = vpop.f32.mrf.mxu0
        %v593 = vadd.f32 0.0, %v592
        %594 = vmatmul.f32.gmra.mxu0 %v531
        %v595 = vpop.f32.mrf.mxu0
        %v596 = vadd.f32 0.0, %v595
        %597 = vmatmul.f32.gmra.mxu0 %v534
        %v598 = vpop.f32.mrf.mxu0
        %v599 = vadd.f32 0.0, %v598
        %600 = vmatmul.f32.gmra.mxu0 %v537
        %v601 = vpop.f32.mrf.mxu0
        %v602 = vadd.f32 0.0, %v601
        %603 = vmatmul.f32.gmra.mxu0 %v540
        %v604 = vpop.f32.mrf.mxu0
        %v605 = vadd.f32 0.0, %v604
        %606 = vmatmul.f32.gmra.mxu0 %v543
        %v607 = vpop.f32.mrf.mxu0
        %v608 = vadd.f32 0.0, %v607
        %609 = vmatmul.f32.gmra.mxu0 %v546
        %v610 = vpop.f32.mrf.mxu0
        %v611 = vadd.f32 0.0, %v610
        %612 = vdwg.mxu0
        %613 = vmatpush.msra.mxu0 0.0
        %614 = vmatpush.msra.mxu0 0.0
        %615 = vmatpush.msra.mxu0 0.0
        %616 = vmatpush.msra.mxu0 0.0
        %617 = vmatpush.msra.mxu0 0.0
        %618 = vmatpush.msra.mxu0 0.0
        %619 = vmatpush.msra.mxu0 0.0
        %620 = vmatpush.msra.mxu0 0.0
        %621 = vmatpush.msra.mxu0 0.0
        %622 = vmatpush.msra.mxu0 0.0
        %623 = vmatpush.msra.mxu0 0.0
        %624 = vmatpush.msra.mxu0 0.0
        %625 = vmatpush.msra.mxu0 0.0
        %626 = vmatpush.msra.mxu0 0.0
        %627 = vmatpush.msra.mxu0 0.0
        %628 = vmatpush.msra.mxu0 %v478
        %629 = vmatmul.f32.gmra.mxu0 %v501
        %v630 = vpop.f32.mrf.mxu0
        %v631 = vadd.f32 0.0, %v630
        %632 = vmatmul.f32.gmra.mxu0 %v504
        %v633 = vpop.f32.mrf.mxu0
        %v634 = vadd.f32 0.0, %v633
        %635 = vmatmul.f32.gmra.mxu0 %v507
        %v636 = vpop.f32.mrf.mxu0
        %v637 = vadd.f32 0.0, %v636
        %638 = vmatmul.f32.gmra.mxu0 %v510
        %v639 = vpop.f32.mrf.mxu0
        %v640 = vadd.f32 0.0, %v639
        %641 = vmatmul.f32.gmra.mxu0 %v513
        %v642 = vpop.f32.mrf.mxu0
        %v643 = vadd.f32 0.0, %v642
        %644 = vmatmul.f32.gmra.mxu0 %v516
        %v645 = vpop.f32.mrf.mxu0
        %v646 = vadd.f32 0.0, %v645
        %647 = vmatmul.f32.gmra.mxu0 %v519
        %v648 = vpop.f32.mrf.mxu0
        %v649 = vadd.f32 0.0, %v648
        %650 = vmatmul.f32.gmra.mxu0 %v522
        %v651 = vpop.f32.mrf.mxu0
        %v652 = vadd.f32 0.0, %v651
        %653 = vmatmul.f32.gmra.mxu0 %v525
        %v654 = vpop.f32.mrf.mxu0
        %v655 = vadd.f32 0.0, %v654
        %656 = vmatmul.f32.gmra.mxu0 %v528
        %v657 = vpop.f32.mrf.mxu0
        %v658 = vadd.f32 0.0, %v657
        %659 = vmatmul.f32.gmra.mxu0 %v531
        %v660 = vpop.f32.mrf.mxu0
        %v661 = vadd.f32 0.0, %v660
        %662 = vmatmul.f32.gmra.mxu0 %v534
        %v663 = vpop.f32.mrf.mxu0
        %v664 = vadd.f32 0.0, %v663
        %665 = vmatmul.f32.gmra.mxu0 %v537
        %v666 = vpop.f32.mrf.mxu0
        %v667 = vadd.f32 0.0, %v666
        %668 = vmatmul.f32.gmra.mxu0 %v540
        %v669 = vpop.f32.mrf.mxu0
        %v670 = vadd.f32 0.0, %v669
        %671 = vmatmul.f32.gmra.mxu0 %v543
        %v672 = vpop.f32.mrf.mxu0
        %v673 = vadd.f32 0.0, %v672
        %674 = vmatmul.f32.gmra.mxu0 %v546
        %v675 = vpop.f32.mrf.mxu0
        %v676 = vadd.f32 0.0, %v675
        %677 = vdwg.mxu0
        %678 = vmatpush.msra.mxu0 0.0
        %679 = vmatpush.msra.mxu0 0.0
        %680 = vmatpush.msra.mxu0 0.0
        %681 = vmatpush.msra.mxu0 0.0
        %682 = vmatpush.msra.mxu0 0.0
        %683 = vmatpush.msra.mxu0 0.0
        %684 = vmatpush.msra.mxu0 0.0
        %685 = vmatpush.msra.mxu0 0.0
        %686 = vmatpush.msra.mxu0 0.0
        %687 = vmatpush.msra.mxu0 0.0
        %688 = vmatpush.msra.mxu0 0.0
        %689 = vmatpush.msra.mxu0 0.0
        %690 = vmatpush.msra.mxu0 0.0
        %691 = vmatpush.msra.mxu0 0.0
        %692 = vmatpush.msra.mxu0 0.0
        %693 = vmatpush.msra.mxu0 %v480
        %694 = vmatmul.f32.gmra.mxu0 %v501
        %v695 = vpop.f32.mrf.mxu0
        %v696 = vadd.f32 0.0, %v695
        %697 = vmatmul.f32.gmra.mxu0 %v504
        %v698 = vpop.f32.mrf.mxu0
        %v699 = vadd.f32 0.0, %v698
        %700 = vmatmul.f32.gmra.mxu0 %v507
        %v701 = vpop.f32.mrf.mxu0
        %v702 = vadd.f32 0.0, %v701
        %703 = vmatmul.f32.gmra.mxu0 %v510
        %v704 = vpop.f32.mrf.mxu0
        %v705 = vadd.f32 0.0, %v704
        %706 = vmatmul.f32.gmra.mxu0 %v513
        %v707 = vpop.f32.mrf.mxu0
        %v708 = vadd.f32 0.0, %v707
        %709 = vmatmul.f32.gmra.mxu0 %v516
        %v710 = vpop.f32.mrf.mxu0
        %v711 = vadd.f32 0.0, %v710
        %712 = vmatmul.f32.gmra.mxu0 %v519
        %v713 = vpop.f32.mrf.mxu0
        %v714 = vadd.f32 0.0, %v713
        %715 = vmatmul.f32.gmra.mxu0 %v522
        %v716 = vpop.f32.mrf.mxu0
        %v717 = vadd.f32 0.0, %v716
        %718 = vmatmul.f32.gmra.mxu0 %v525
        %v719 = vpop.f32.mrf.mxu0
        %v720 = vadd.f32 0.0, %v719
        %721 = vmatmul.f32.gmra.mxu0 %v528
        %v722 = vpop.f32.mrf.mxu0
        %v723 = vadd.f32 0.0, %v722
        %724 = vmatmul.f32.gmra.mxu0 %v531
        %v725 = vpop.f32.mrf.mxu0
        %v726 = vadd.f32 0.0, %v725
        %727 = vmatmul.f32.gmra.mxu0 %v534
        %v728 = vpop.f32.mrf.mxu0
        %v729 = vadd.f32 0.0, %v728
        %730 = vmatmul.f32.gmra.mxu0 %v537
        %v731 = vpop.f32.mrf.mxu0
        %v732 = vadd.f32 0.0, %v731
        %733 = vmatmul.f32.gmra.mxu0 %v540
        %v734 = vpop.f32.mrf.mxu0
        %v735 = vadd.f32 0.0, %v734
        %736 = vmatmul.f32.gmra.mxu0 %v543
        %v737 = vpop.f32.mrf.mxu0
        %v738 = vadd.f32 0.0, %v737
        %739 = vmatmul.f32.gmra.mxu0 %v546
        %v740 = vpop.f32.mrf.mxu0
        %v741 = vadd.f32 0.0, %v740
        %742 = vdwg.mxu0
        %743 = vmatpush.msra.mxu0 0.0
        %744 = vmatpush.msra.mxu0 0.0
        %745 = vmatpush.msra.mxu0 0.0
        %746 = vmatpush.msra.mxu0 0.0
        %747 = vmatpush.msra.mxu0 0.0
        %748 = vmatpush.msra.mxu0 0.0
        %749 = vmatpush.msra.mxu0 0.0
        %750 = vmatpush.msra.mxu0 0.0
        %751 = vmatpush.msra.mxu0 0.0
        %752 = vmatpush.msra.mxu0 0.0
        %753 = vmatpush.msra.mxu0 0.0
        %754 = vmatpush.msra.mxu0 0.0
        %755 = vmatpush.msra.mxu0 0.0
        %756 = vmatpush.msra.mxu0 0.0
        %757 = vmatpush.msra.mxu0 0.0
        %758 = vmatpush.msra.mxu0 %v482
        %759 = vmatmul.f32.gmra.mxu0 %v501
        %v760 = vpop.f32.mrf.mxu0
        %v761 = vadd.f32 0.0, %v760
        %762 = vmatmul.f32.gmra.mxu0 %v504
        %v763 = vpop.f32.mrf.mxu0
        %v764 = vadd.f32 0.0, %v763
        %765 = vmatmul.f32.gmra.mxu0 %v507
        %v766 = vpop.f32.mrf.mxu0
        %v767 = vadd.f32 0.0, %v766
        %768 = vmatmul.f32.gmra.mxu0 %v510
        %v769 = vpop.f32.mrf.mxu0
        %v770 = vadd.f32 0.0, %v769
        %771 = vmatmul.f32.gmra.mxu0 %v513
        %v772 = vpop.f32.mrf.mxu0
        %v773 = vadd.f32 0.0, %v772
        %774 = vmatmul.f32.gmra.mxu0 %v516
        %v775 = vpop.f32.mrf.mxu0
        %v776 = vadd.f32 0.0, %v775
        %777 = vmatmul.f32.gmra.mxu0 %v519
        %v778 = vpop.f32.mrf.mxu0
        %v779 = vadd.f32 0.0, %v778
        %780 = vmatmul.f32.gmra.mxu0 %v522
        %v781 = vpop.f32.mrf.mxu0
        %v782 = vadd.f32 0.0, %v781
        %783 = vmatmul.f32.gmra.mxu0 %v525
        %v784 = vpop.f32.mrf.mxu0
        %v785 = vadd.f32 0.0, %v784
        %786 = vmatmul.f32.gmra.mxu0 %v528
        %v787 = vpop.f32.mrf.mxu0
        %v788 = vadd.f32 0.0, %v787
        %789 = vmatmul.f32.gmra.mxu0 %v531
        %v790 = vpop.f32.mrf.mxu0
        %v791 = vadd.f32 0.0, %v790
        %792 = vmatmul.f32.gmra.mxu0 %v534
        %v793 = vpop.f32.mrf.mxu0
        %v794 = vadd.f32 0.0, %v793
        %795 = vmatmul.f32.gmra.mxu0 %v537
        %v796 = vpop.f32.mrf.mxu0
        %v797 = vadd.f32 0.0, %v796
        %798 = vmatmul.f32.gmra.mxu0 %v540
        %v799 = vpop.f32.mrf.mxu0
        %v800 = vadd.f32 0.0, %v799
        %801 = vmatmul.f32.gmra.mxu0 %v543
        %v802 = vpop.f32.mrf.mxu0
        %v803 = vadd.f32 0.0, %v802
        %804 = vmatmul.f32.gmra.mxu0 %v546
        %v805 = vpop.f32.mrf.mxu0
        %v806 = vadd.f32 0.0, %v805
        %807 = vdwg.mxu0
        %v808 = vld [vmem:[%s3] sm:$0xff]
        %v809 = vld [vmem:[%s3 + $0x8] sm:$0xff]
        %v810 = vld [vmem:[%s3 + $0x10] sm:$0xff]
        %v811 = vld [vmem:[%s3 + $0x18] sm:$0xff]
        %v812 = vld [vmem:[%s3 + $0x20] sm:$0xff]
        %v813 = vld [vmem:[%s3 + $0x28] sm:$0xff]
        %v814 = vld [vmem:[%s3 + $0x30] sm:$0xff]
        %v815 = vld [vmem:[%s3 + $0x38] sm:$0xff]
        %v816 = vld [vmem:[%s3 + $0x40] sm:$0xff]
        %v817 = vld [vmem:[%s3 + $0x48] sm:$0xff]
        %v818 = vld [vmem:[%s3 + $0x50] sm:$0xff]
        %v819 = vld [vmem:[%s3 + $0x58] sm:$0xff]
        %v820 = vld [vmem:[%s3 + $0x60] sm:$0xff]
        %v821 = vld [vmem:[%s3 + $0x68] sm:$0xff]
        %v822 = vld [vmem:[%s3 + $0x70] sm:$0xff]
        %v823 = vld [vmem:[%s3 + $0x78] sm:$0xff]
        %825 = vset.pattern.permute.xlu0 0
        %826 = vperm.xlu0 %825, %v808
        %v827 = vpop.permute.xlu0 %826
        %830 = vset.pattern.permute.xlu0 0
        %831 = vperm.xlu0 %830, %v809
        %v832 = vpop.permute.xlu0 %831
        %835 = vset.pattern.permute.xlu0 0
        %836 = vperm.xlu0 %835, %v810
        %v837 = vpop.permute.xlu0 %836
        %840 = vset.pattern.permute.xlu0 0
        %841 = vperm.xlu0 %840, %v811
        %v842 = vpop.permute.xlu0 %841
        %845 = vset.pattern.permute.xlu0 0
        %846 = vperm.xlu0 %845, %v812
        %v847 = vpop.permute.xlu0 %846
        %850 = vset.pattern.permute.xlu0 0
        %851 = vperm.xlu0 %850, %v813
        %v852 = vpop.permute.xlu0 %851
        %855 = vset.pattern.permute.xlu0 0
        %856 = vperm.xlu0 %855, %v814
        %v857 = vpop.permute.xlu0 %856
        %860 = vset.pattern.permute.xlu0 0
        %861 = vperm.xlu0 %860, %v815
        %v862 = vpop.permute.xlu0 %861
        %865 = vset.pattern.permute.xlu0 0
        %866 = vperm.xlu0 %865, %v816
        %v867 = vpop.permute.xlu0 %866
        %870 = vset.pattern.permute.xlu0 0
        %871 = vperm.xlu0 %870, %v817
        %v872 = vpop.permute.xlu0 %871
        %875 = vset.pattern.permute.xlu0 0
        %876 = vperm.xlu0 %875, %v818
        %v877 = vpop.permute.xlu0 %876
        %880 = vset.pattern.permute.xlu0 0
        %881 = vperm.xlu0 %880, %v819
        %v882 = vpop.permute.xlu0 %881
        %885 = vset.pattern.permute.xlu0 0
        %886 = vperm.xlu0 %885, %v820
        %v887 = vpop.permute.xlu0 %886
        %890 = vset.pattern.permute.xlu0 0
        %891 = vperm.xlu0 %890, %v821
        %v892 = vpop.permute.xlu0 %891
        %895 = vset.pattern.permute.xlu0 0
        %896 = vperm.xlu0 %895, %v822
        %v897 = vpop.permute.xlu0 %896
        %900 = vset.pattern.permute.xlu0 0
        %901 = vperm.xlu0 %900, %v823
        %v902 = vpop.permute.xlu0 %901
        %v904 = vsub.f32 %v566, %v827
        %v905 = vsub.f32 %v631, %v827
        %v906 = vsub.f32 %v696, %v827
        %v907 = vsub.f32 %v761, %v827
        %v908 = vsub.f32 %v569, %v832
        %v909 = vsub.f32 %v634, %v832
        %v910 = vsub.f32 %v699, %v832
        %v911 = vsub.f32 %v764, %v832
        %v912 = vsub.f32 %v572, %v837
        %v913 = vsub.f32 %v637, %v837
        %v914 = vsub.f32 %v702, %v837
        %v915 = vsub.f32 %v767, %v837
        %v916 = vsub.f32 %v575, %v842
        %v917 = vsub.f32 %v640, %v842
        %v918 = vsub.f32 %v705, %v842
        %v919 = vsub.f32 %v770, %v842
        %v920 = vsub.f32 %v578, %v847
        %v921 = vsub.f32 %v643, %v847
        %v922 = vsub.f32 %v708, %v847
        %v923 = vsub.f32 %v773, %v847
        %v924 = vsub.f32 %v581, %v852
        %v925 = vsub.f32 %v646, %v852
        %v926 = vsub.f32 %v711, %v852
        %v927 = vsub.f32 %v776, %v852
        %v928 = vsub.f32 %v584, %v857
        %v929 = vsub.f32 %v649, %v857
        %v930 = vsub.f32 %v714, %v857
        %v931 = vsub.f32 %v779, %v857
        %v932 = vsub.f32 %v587, %v862
        %v933 = vsub.f32 %v652, %v862
        %v934 = vsub.f32 %v717, %v862
        %v935 = vsub.f32 %v782, %v862
        %v936 = vsub.f32 %v590, %v867
        %v937 = vsub.f32 %v655, %v867
        %v938 = vsub.f32 %v720, %v867
        %v939 = vsub.f32 %v785, %v867
        %v940 = vsub.f32 %v593, %v872
        %v941 = vsub.f32 %v658, %v872
        %v942 = vsub.f32 %v723, %v872
        %v943 = vsub.f32 %v788, %v872
        %v944 = vsub.f32 %v596, %v877
        %v945 = vsub.f32 %v661, %v877
        %v946 = vsub.f32 %v726, %v877
        %v947 = vsub.f32 %v791, %v877
        %v948 = vsub.f32 %v599, %v882
        %v949 = vsub.f32 %v664, %v882
        %v950 = vsub.f32 %v729, %v882
        %v951 = vsub.f32 %v794, %v882
        %v952 = vsub.f32 %v602, %v887
        %v953 = vsub.f32 %v667, %v887
        %v954 = vsub.f32 %v732, %v887
        %v955 = vsub.f32 %v797, %v887
        %v956 = vsub.f32 %v605, %v892
        %v957 = vsub.f32 %v670, %v892
        %v958 = vsub.f32 %v735, %v892
        %v959 = vsub.f32 %v800, %v892
        %v960 = vsub.f32 %v608, %v897
        %v961 = vsub.f32 %v673, %v897
        %v962 = vsub.f32 %v738, %v897
        %v963 = vsub.f32 %v803, %v897
        %v964 = vsub.f32 %v611, %v902
        %v965 = vsub.f32 %v676, %v902
        %v966 = vsub.f32 %v741, %v902
        %v967 = vsub.f32 %v806, %v902
        %v968 = vand.u32 2147483647, %v904
        %v969 = vand.u32 2147483647, %v905
        %v970 = vand.u32 2147483647, %v906
        %v971 = vand.u32 2147483647, %v907
        %v972 = vand.u32 2147483647, %v908
        %v973 = vand.u32 2147483647, %v909
        %v974 = vand.u32 2147483647, %v910
        %v975 = vand.u32 2147483647, %v911
        %v976 = vand.u32 2147483647, %v912
        %v977 = vand.u32 2147483647, %v913
        %v978 = vand.u32 2147483647, %v914
        %v979 = vand.u32 2147483647, %v915
        %v980 = vand.u32 2147483647, %v916
        %v981 = vand.u32 2147483647, %v917
        %v982 = vand.u32 2147483647, %v918
        %v983 = vand.u32 2147483647, %v919
        %v984 = vand.u32 2147483647, %v920
        %v985 = vand.u32 2147483647, %v921
        %v986 = vand.u32 2147483647, %v922
        %v987 = vand.u32 2147483647, %v923
        %v988 = vand.u32 2147483647, %v924
        %v989 = vand.u32 2147483647, %v925
        %v990 = vand.u32 2147483647, %v926
        %v991 = vand.u32 2147483647, %v927
        %v992 = vand.u32 2147483647, %v928
        %v993 = vand.u32 2147483647, %v929
        %v994 = vand.u32 2147483647, %v930
        %v995 = vand.u32 2147483647, %v931
        %v996 = vand.u32 2147483647, %v932
        %v997 = vand.u32 2147483647, %v933
        %v998 = vand.u32 2147483647, %v934
        %v999 = vand.u32 2147483647, %v935
        %v1000 = vand.u32 2147483647, %v936
        %v1001 = vand.u32 2147483647, %v937
        %v1002 = vand.u32 2147483647, %v938
        %v1003 = vand.u32 2147483647, %v939
        %v1004 = vand.u32 2147483647, %v940
        %v1005 = vand.u32 2147483647, %v941
        %v1006 = vand.u32 2147483647, %v942
        %v1007 = vand.u32 2147483647, %v943
        %v1008 = vand.u32 2147483647, %v944
        %v1009 = vand.u32 2147483647, %v945
        %v1010 = vand.u32 2147483647, %v946
        %v1011 = vand.u32 2147483647, %v947
        %v1012 = vand.u32 2147483647, %v948
        %v1013 = vand.u32 2147483647, %v949
        %v1014 = vand.u32 2147483647, %v950
        %v1015 = vand.u32 2147483647, %v951
        %v1016 = vand.u32 2147483647, %v952
        %v1017 = vand.u32 2147483647, %v953
        %v1018 = vand.u32 2147483647, %v954
        %v1019 = vand.u32 2147483647, %v955
        %v1020 = vand.u32 2147483647, %v956
        %v1021 = vand.u32 2147483647, %v957
        %v1022 = vand.u32 2147483647, %v958
        %v1023 = vand.u32 2147483647, %v959
        %v1024 = vand.u32 2147483647, %v960
        %v1025 = vand.u32 2147483647, %v961
        %v1026 = vand.u32 2147483647, %v962
        %v1027 = vand.u32 2147483647, %v963
        %v1028 = vand.u32 2147483647, %v964
        %v1029 = vand.u32 2147483647, %v965
        %v1030 = vand.u32 2147483647, %v966
        %v1031 = vand.u32 2147483647, %v967
        %v1032 = vld [vmem:[%s4] sm:$0xff]
        %v1033 = vld [vmem:[%s4 + $0x8] sm:$0xff]
        %v1034 = vld [vmem:[%s4 + $0x10] sm:$0xff]
        %v1035 = vld [vmem:[%s4 + $0x18] sm:$0xff]
        %v1036 = vld [vmem:[%s4 + $0x20] sm:$0xff]
        %v1037 = vld [vmem:[%s4 + $0x28] sm:$0xff]
        %v1038 = vld [vmem:[%s4 + $0x30] sm:$0xff]
        %v1039 = vld [vmem:[%s4 + $0x38] sm:$0xff]
        %v1040 = vld [vmem:[%s4 + $0x40] sm:$0xff]
        %v1041 = vld [vmem:[%s4 + $0x48] sm:$0xff]
        %v1042 = vld [vmem:[%s4 + $0x50] sm:$0xff]
        %v1043 = vld [vmem:[%s4 + $0x58] sm:$0xff]
        %v1044 = vld [vmem:[%s4 + $0x60] sm:$0xff]
        %v1045 = vld [vmem:[%s4 + $0x68] sm:$0xff]
        %v1046 = vld [vmem:[%s4 + $0x70] sm:$0xff]
        %v1047 = vld [vmem:[%s4 + $0x78] sm:$0xff]
        %1049 = vset.pattern.permute.xlu0 0
        %1050 = vperm.xlu0 %1049, %v1032
        %v1051 = vpop.permute.xlu0 %1050
        %1054 = vset.pattern.permute.xlu0 0
        %1055 = vperm.xlu0 %1054, %v1033
        %v1056 = vpop.permute.xlu0 %1055
        %1059 = vset.pattern.permute.xlu0 0
        %1060 = vperm.xlu0 %1059, %v1034
        %v1061 = vpop.permute.xlu0 %1060
        %1064 = vset.pattern.permute.xlu0 0
        %1065 = vperm.xlu0 %1064, %v1035
        %v1066 = vpop.permute.xlu0 %1065
        %1069 = vset.pattern.permute.xlu0 0
        %1070 = vperm.xlu0 %1069, %v1036
        %v1071 = vpop.permute.xlu0 %1070
        %1074 = vset.pattern.permute.xlu0 0
        %1075 = vperm.xlu0 %1074, %v1037
        %v1076 = vpop.permute.xlu0 %1075
        %1079 = vset.pattern.permute.xlu0 0
        %1080 = vperm.xlu0 %1079, %v1038
        %v1081 = vpop.permute.xlu0 %1080
        %1084 = vset.pattern.permute.xlu0 0
        %1085 = vperm.xlu0 %1084, %v1039
        %v1086 = vpop.permute.xlu0 %1085
        %1089 = vset.pattern.permute.xlu0 0
        %1090 = vperm.xlu0 %1089, %v1040
        %v1091 = vpop.permute.xlu0 %1090
        %1094 = vset.pattern.permute.xlu0 0
        %1095 = vperm.xlu0 %1094, %v1041
        %v1096 = vpop.permute.xlu0 %1095
        %1099 = vset.pattern.permute.xlu0 0
        %1100 = vperm.xlu0 %1099, %v1042
        %v1101 = vpop.permute.xlu0 %1100
        %1104 = vset.pattern.permute.xlu0 0
        %1105 = vperm.xlu0 %1104, %v1043
        %v1106 = vpop.permute.xlu0 %1105
        %1109 = vset.pattern.permute.xlu0 0
        %1110 = vperm.xlu0 %1109, %v1044
        %v1111 = vpop.permute.xlu0 %1110
        %1114 = vset.pattern.permute.xlu0 0
        %1115 = vperm.xlu0 %1114, %v1045
        %v1116 = vpop.permute.xlu0 %1115
        %1119 = vset.pattern.permute.xlu0 0
        %1120 = vperm.xlu0 %1119, %v1046
        %v1121 = vpop.permute.xlu0 %1120
        %1124 = vset.pattern.permute.xlu0 0
        %1125 = vperm.xlu0 %1124, %v1047
        %v1126 = vpop.permute.xlu0 %1125
        %v1128 = vmul.f32 %v968, %v1051
        %v1129 = vmul.f32 %v969, %v1051
        %v1130 = vmul.f32 %v970, %v1051
        %v1131 = vmul.f32 %v971, %v1051
        %v1132 = vmul.f32 %v972, %v1056
        %v1133 = vmul.f32 %v973, %v1056
        %v1134 = vmul.f32 %v974, %v1056
        %v1135 = vmul.f32 %v975, %v1056
        %v1136 = vmul.f32 %v976, %v1061
        %v1137 = vmul.f32 %v977, %v1061
        %v1138 = vmul.f32 %v978, %v1061
        %v1139 = vmul.f32 %v979, %v1061
        %v1140 = vmul.f32 %v980, %v1066
        %v1141 = vmul.f32 %v981, %v1066
        %v1142 = vmul.f32 %v982, %v1066
        %v1143 = vmul.f32 %v983, %v1066
        %v1144 = vmul.f32 %v984, %v1071
        %v1145 = vmul.f32 %v985, %v1071
        %v1146 = vmul.f32 %v986, %v1071
        %v1147 = vmul.f32 %v987, %v1071
        %v1148 = vmul.f32 %v988, %v1076
        %v1149 = vmul.f32 %v989, %v1076
        %v1150 = vmul.f32 %v990, %v1076
        %v1151 = vmul.f32 %v991, %v1076
        %v1152 = vmul.f32 %v992, %v1081
        %v1153 = vmul.f32 %v993, %v1081
        %v1154 = vmul.f32 %v994, %v1081
        %v1155 = vmul.f32 %v995, %v1081
        %v1156 = vmul.f32 %v996, %v1086
        %v1157 = vmul.f32 %v997, %v1086
        %v1158 = vmul.f32 %v998, %v1086
        %v1159 = vmul.f32 %v999, %v1086
        %v1160 = vmul.f32 %v1000, %v1091
        %v1161 = vmul.f32 %v1001, %v1091
        %v1162 = vmul.f32 %v1002, %v1091
        %v1163 = vmul.f32 %v1003, %v1091
        %v1164 = vmul.f32 %v1004, %v1096
        %v1165 = vmul.f32 %v1005, %v1096
        %v1166 = vmul.f32 %v1006, %v1096
        %v1167 = vmul.f32 %v1007, %v1096
        %v1168 = vmul.f32 %v1008, %v1101
        %v1169 = vmul.f32 %v1009, %v1101
        %v1170 = vmul.f32 %v1010, %v1101
        %v1171 = vmul.f32 %v1011, %v1101
        %v1172 = vmul.f32 %v1012, %v1106
        %v1173 = vmul.f32 %v1013, %v1106
        %v1174 = vmul.f32 %v1014, %v1106
        %v1175 = vmul.f32 %v1015, %v1106
        %v1176 = vmul.f32 %v1016, %v1111
        %v1177 = vmul.f32 %v1017, %v1111
        %v1178 = vmul.f32 %v1018, %v1111
        %v1179 = vmul.f32 %v1019, %v1111
        %v1180 = vmul.f32 %v1020, %v1116
        %v1181 = vmul.f32 %v1021, %v1116
        %v1182 = vmul.f32 %v1022, %v1116
        %v1183 = vmul.f32 %v1023, %v1116
        %v1184 = vmul.f32 %v1024, %v1121
        %v1185 = vmul.f32 %v1025, %v1121
        %v1186 = vmul.f32 %v1026, %v1121
        %v1187 = vmul.f32 %v1027, %v1121
        %v1188 = vmul.f32 %v1028, %v1126
        %v1189 = vmul.f32 %v1029, %v1126
        %v1190 = vmul.f32 %v1030, %v1126
        %v1191 = vmul.f32 %v1031, %v1126
        %v1192 = vsub.f32 1.0, %v1128
        %v1193 = vsub.f32 1.0, %v1129
        %v1194 = vsub.f32 1.0, %v1130
        %v1195 = vsub.f32 1.0, %v1131
        %v1196 = vsub.f32 1.0, %v1132
        %v1197 = vsub.f32 1.0, %v1133
        %v1198 = vsub.f32 1.0, %v1134
        %v1199 = vsub.f32 1.0, %v1135
        %v1200 = vsub.f32 1.0, %v1136
        %v1201 = vsub.f32 1.0, %v1137
        %v1202 = vsub.f32 1.0, %v1138
        %v1203 = vsub.f32 1.0, %v1139
        %v1204 = vsub.f32 1.0, %v1140
        %v1205 = vsub.f32 1.0, %v1141
        %v1206 = vsub.f32 1.0, %v1142
        %v1207 = vsub.f32 1.0, %v1143
        %v1208 = vsub.f32 1.0, %v1144
        %v1209 = vsub.f32 1.0, %v1145
        %v1210 = vsub.f32 1.0, %v1146
        %v1211 = vsub.f32 1.0, %v1147
        %v1212 = vsub.f32 1.0, %v1148
        %v1213 = vsub.f32 1.0, %v1149
        %v1214 = vsub.f32 1.0, %v1150
        %v1215 = vsub.f32 1.0, %v1151
        %v1216 = vsub.f32 1.0, %v1152
        %v1217 = vsub.f32 1.0, %v1153
        %v1218 = vsub.f32 1.0, %v1154
        %v1219 = vsub.f32 1.0, %v1155
        %v1220 = vsub.f32 1.0, %v1156
        %v1221 = vsub.f32 1.0, %v1157
        %v1222 = vsub.f32 1.0, %v1158
        %v1223 = vsub.f32 1.0, %v1159
        %v1224 = vsub.f32 1.0, %v1160
        %v1225 = vsub.f32 1.0, %v1161
        %v1226 = vsub.f32 1.0, %v1162
        %v1227 = vsub.f32 1.0, %v1163
        %v1228 = vsub.f32 1.0, %v1164
        %v1229 = vsub.f32 1.0, %v1165
        %v1230 = vsub.f32 1.0, %v1166
        %v1231 = vsub.f32 1.0, %v1167
        %v1232 = vsub.f32 1.0, %v1168
        %v1233 = vsub.f32 1.0, %v1169
        %v1234 = vsub.f32 1.0, %v1170
        %v1235 = vsub.f32 1.0, %v1171
        %v1236 = vsub.f32 1.0, %v1172
        %v1237 = vsub.f32 1.0, %v1173
        %v1238 = vsub.f32 1.0, %v1174
        %v1239 = vsub.f32 1.0, %v1175
        %v1240 = vsub.f32 1.0, %v1176
        %v1241 = vsub.f32 1.0, %v1177
        %v1242 = vsub.f32 1.0, %v1178
        %v1243 = vsub.f32 1.0, %v1179
        %v1244 = vsub.f32 1.0, %v1180
        %v1245 = vsub.f32 1.0, %v1181
        %v1246 = vsub.f32 1.0, %v1182
        %v1247 = vsub.f32 1.0, %v1183
        %v1248 = vsub.f32 1.0, %v1184
        %v1249 = vsub.f32 1.0, %v1185
        %v1250 = vsub.f32 1.0, %v1186
        %v1251 = vsub.f32 1.0, %v1187
        %v1252 = vsub.f32 1.0, %v1188
        %v1253 = vsub.f32 1.0, %v1189
        %v1254 = vsub.f32 1.0, %v1190
        %v1255 = vsub.f32 1.0, %v1191
        %v1256 = vmax.f32 %v1192, 0.0
        %v1257 = vmax.f32 %v1193, 0.0
        %v1258 = vmax.f32 %v1194, 0.0
        %v1259 = vmax.f32 %v1195, 0.0
        %v1260 = vmax.f32 %v1196, 0.0
        %v1261 = vmax.f32 %v1197, 0.0
        %v1262 = vmax.f32 %v1198, 0.0
        %v1263 = vmax.f32 %v1199, 0.0
        %v1264 = vmax.f32 %v1200, 0.0
        %v1265 = vmax.f32 %v1201, 0.0
        %v1266 = vmax.f32 %v1202, 0.0
        %v1267 = vmax.f32 %v1203, 0.0
        %v1268 = vmax.f32 %v1204, 0.0
        %v1269 = vmax.f32 %v1205, 0.0
        %v1270 = vmax.f32 %v1206, 0.0
        %v1271 = vmax.f32 %v1207, 0.0
        %v1272 = vmax.f32 %v1208, 0.0
        %v1273 = vmax.f32 %v1209, 0.0
        %v1274 = vmax.f32 %v1210, 0.0
        %v1275 = vmax.f32 %v1211, 0.0
        %v1276 = vmax.f32 %v1212, 0.0
        %v1277 = vmax.f32 %v1213, 0.0
        %v1278 = vmax.f32 %v1214, 0.0
        %v1279 = vmax.f32 %v1215, 0.0
        %v1280 = vmax.f32 %v1216, 0.0
        %v1281 = vmax.f32 %v1217, 0.0
        %v1282 = vmax.f32 %v1218, 0.0
        %v1283 = vmax.f32 %v1219, 0.0
        %v1284 = vmax.f32 %v1220, 0.0
        %v1285 = vmax.f32 %v1221, 0.0
        %v1286 = vmax.f32 %v1222, 0.0
        %v1287 = vmax.f32 %v1223, 0.0
        %v1288 = vmax.f32 %v1224, 0.0
        %v1289 = vmax.f32 %v1225, 0.0
        %v1290 = vmax.f32 %v1226, 0.0
        %v1291 = vmax.f32 %v1227, 0.0
        %v1292 = vmax.f32 %v1228, 0.0
        %v1293 = vmax.f32 %v1229, 0.0
        %v1294 = vmax.f32 %v1230, 0.0
        %v1295 = vmax.f32 %v1231, 0.0
        %v1296 = vmax.f32 %v1232, 0.0
        %v1297 = vmax.f32 %v1233, 0.0
        %v1298 = vmax.f32 %v1234, 0.0
        %v1299 = vmax.f32 %v1235, 0.0
        %v1300 = vmax.f32 %v1236, 0.0
        %v1301 = vmax.f32 %v1237, 0.0
        %v1302 = vmax.f32 %v1238, 0.0
        %v1303 = vmax.f32 %v1239, 0.0
        %v1304 = vmax.f32 %v1240, 0.0
        %v1305 = vmax.f32 %v1241, 0.0
        %v1306 = vmax.f32 %v1242, 0.0
        %v1307 = vmax.f32 %v1243, 0.0
        %v1308 = vmax.f32 %v1244, 0.0
        %v1309 = vmax.f32 %v1245, 0.0
        %v1310 = vmax.f32 %v1246, 0.0
        %v1311 = vmax.f32 %v1247, 0.0
        %v1312 = vmax.f32 %v1248, 0.0
        %v1313 = vmax.f32 %v1249, 0.0
        %v1314 = vmax.f32 %v1250, 0.0
        %v1315 = vmax.f32 %v1251, 0.0
        %v1316 = vmax.f32 %v1252, 0.0
        %v1317 = vmax.f32 %v1253, 0.0
        %v1318 = vmax.f32 %v1254, 0.0
        %v1319 = vmax.f32 %v1255, 0.0
        %v1320 = vld [vmem:[%s5] sm:$0xff]
        %1321 = vmatpush.msra.mxu0 %v1316
        %1322 = vmatpush.msra.mxu0 %v1312
        %1323 = vmatpush.msra.mxu0 %v1308
        %1324 = vmatpush.msra.mxu0 %v1304
        %1325 = vmatpush.msra.mxu0 %v1300
        %1326 = vmatpush.msra.mxu0 %v1296
        %1327 = vmatpush.msra.mxu0 %v1292
        %1328 = vmatpush.msra.mxu0 %v1288
        %1329 = vmatpush.msra.mxu0 %v1284
        %1330 = vmatpush.msra.mxu0 %v1280
        %1331 = vmatpush.msra.mxu0 %v1276
        %1332 = vmatpush.msra.mxu0 %v1272
        %1333 = vmatpush.msra.mxu0 %v1268
        %1334 = vmatpush.msra.mxu0 %v1264
        %1335 = vmatpush.msra.mxu0 %v1260
        %1336 = vmatpush.msra.mxu0 %v1256
        %1337 = vmatmul.f32.gmra.mxu0 %v1320
        %v1338 = vpop.f32.mrf.mxu0
        %v1339 = vadd.f32 0.0, %v1338
        %1340 = vdwg.mxu0
        %1341 = vmatpush.msra.mxu0 %v1317
        %1342 = vmatpush.msra.mxu0 %v1313
        %1343 = vmatpush.msra.mxu0 %v1309
        %1344 = vmatpush.msra.mxu0 %v1305
        %1345 = vmatpush.msra.mxu0 %v1301
        %1346 = vmatpush.msra.mxu0 %v1297
        %1347 = vmatpush.msra.mxu0 %v1293
        %1348 = vmatpush.msra.mxu0 %v1289
        %1349 = vmatpush.msra.mxu0 %v1285
        %1350 = vmatpush.msra.mxu0 %v1281
        %1351 = vmatpush.msra.mxu0 %v1277
        %1352 = vmatpush.msra.mxu0 %v1273
        %1353 = vmatpush.msra.mxu0 %v1269
        %1354 = vmatpush.msra.mxu0 %v1265
        %1355 = vmatpush.msra.mxu0 %v1261
        %1356 = vmatpush.msra.mxu0 %v1257
        %1357 = vmatmul.f32.gmra.mxu0 %v1320
        %v1358 = vpop.f32.mrf.mxu0
        %v1359 = vadd.f32 0.0, %v1358
        %1360 = vdwg.mxu0
        %1361 = vmatpush.msra.mxu0 %v1318
        %1362 = vmatpush.msra.mxu0 %v1314
        %1363 = vmatpush.msra.mxu0 %v1310
        %1364 = vmatpush.msra.mxu0 %v1306
        %1365 = vmatpush.msra.mxu0 %v1302
        %1366 = vmatpush.msra.mxu0 %v1298
        %1367 = vmatpush.msra.mxu0 %v1294
        %1368 = vmatpush.msra.mxu0 %v1290
        %1369 = vmatpush.msra.mxu0 %v1286
        %1370 = vmatpush.msra.mxu0 %v1282
        %1371 = vmatpush.msra.mxu0 %v1278
        %1372 = vmatpush.msra.mxu0 %v1274
        %1373 = vmatpush.msra.mxu0 %v1270
        %1374 = vmatpush.msra.mxu0 %v1266
        %1375 = vmatpush.msra.mxu0 %v1262
        %1376 = vmatpush.msra.mxu0 %v1258
        %1377 = vmatmul.f32.gmra.mxu0 %v1320
        %v1378 = vpop.f32.mrf.mxu0
        %v1379 = vadd.f32 0.0, %v1378
        %1380 = vdwg.mxu0
        %1381 = vmatpush.msra.mxu0 %v1319
        %1382 = vmatpush.msra.mxu0 %v1315
        %1383 = vmatpush.msra.mxu0 %v1311
        %1384 = vmatpush.msra.mxu0 %v1307
        %1385 = vmatpush.msra.mxu0 %v1303
        %1386 = vmatpush.msra.mxu0 %v1299
        %1387 = vmatpush.msra.mxu0 %v1295
        %1388 = vmatpush.msra.mxu0 %v1291
        %1389 = vmatpush.msra.mxu0 %v1287
        %1390 = vmatpush.msra.mxu0 %v1283
        %1391 = vmatpush.msra.mxu0 %v1279
        %1392 = vmatpush.msra.mxu0 %v1275
        %1393 = vmatpush.msra.mxu0 %v1271
        %1394 = vmatpush.msra.mxu0 %v1267
        %1395 = vmatpush.msra.mxu0 %v1263
        %1396 = vmatpush.msra.mxu0 %v1259
        %1397 = vmatmul.f32.gmra.mxu0 %v1320
        %v1398 = vpop.f32.mrf.mxu0
        %v1399 = vadd.f32 0.0, %v1398
        %1400 = vdwg.mxu0
        %v1401 = vmul.f32 %v1339, 0.5
        %v1402 = vmul.f32 %v1359, 0.5
        %v1403 = vmul.f32 %v1379, 0.5
        %v1404 = vmul.f32 %v1399, 0.5
        %v1405 = vadd.f32 %v1401, 0.5
        %v1406 = vadd.f32 %v1402, 0.5
        %v1407 = vadd.f32 %v1403, 0.5
        %v1408 = vadd.f32 %v1404, 0.5
        %v1413 = vrot.slane %v1406, 7
        %v1414 = vrot.slane %v1407, 6
        %v1415 = vrot.slane %v1408, 5
        %vm1416 = vcmask 1040384
        %v1417 = vsel %vm1416, %v1405, %v1413
        %vm1418 = vcmask 1042434
        %v1419 = vsel %vm1418, %v1414, %v1415
        %vm1420 = vcmask 1041408
        %v1421 = vsel %vm1420, %v1417, %v1419
        %v1423 = vlaneseq
        %vm1424 = vcmp.ge.s32.totalorder %v1423, 0
        %vm1425 = vcmp.lt.s32.totalorder %v1423, 512
        %vm1426 = vmand %vm1424, %vm1425
        %1427 = vst.msk [vmem:[%s299] sm:$0xf] %vm1426, %v1421
        %s1428 = sand.u32 %s159, 1
        %s1429 = scalar_lea.sflag [#allocation4], %s1428
        %s1430 = sand.u32 %s159, 1
        %s1431 = smul.addr %s1430, 4
        %s1432 = scalar_lea.vmem [#allocation3], %s1431
        // Predicated region
        $region68: #{tpu_custom_call.1} parent=62 // pred_check
          %p1433 = pneg %p169
        $region69: #{tpu_custom_call.1} parent=62 // pred_check_branch
          %1435 = sbr.rel (%p1433) target = $region71
        $region70: #{tpu_custom_call.1} parent=62 // pred_region
          %s1436 = smul.u32 4, %s20
          %1438 = vsyncadd %s1429, 0
          %s1439 = scalar_lea.hbm %s6, %s1436
          %s1441 = sshll.u32 %s1432, 4
          %s1442 = int_to_ptr.vmem [resolvable:$true] %s1441
          %s1443 = sshll.u32 %s1439, 4
          %s1444 = int_to_ptr.hbm [resolvable:$true] %s1443
          %1446 = dma.vmem_to_hbm [thread:$0]  %s1442, 64, %s1444, %s1429
        $region71: #{tpu_custom_call.1} parent=62 // pred_fallthru
          _
      $region63: #{tpu_custom_call.1} parent=5 // pred_fallthru
        _
      %p1447 = scmp.le.s32.totalorder 2, %s15
      // Predicated region
      $region72: #{tpu_custom_call.1} parent=5 // pred_check
        %p1448 = pneg %p1447
      $region73: #{tpu_custom_call.1} parent=5 // pred_check_branch
        %1450 = sbr.rel (%p1448) target = $region75
      $region74: #{tpu_custom_call.1} parent=5 // pred_region
        %s1451 = ssub.s32 %s15, 2
        // Predicated region
        $region76: #{tpu_custom_call.1} parent=74 // pred_check
          %p1452 = pneg %p175
        $region77: #{tpu_custom_call.1} parent=74 // pred_check_branch
          %1454 = sbr.rel (%p1452) target = $region79
        $region78: #{tpu_custom_call.1} parent=74 // pred_region
          %s1455 = sand.u32 %s160, 1
          %s1456 = scalar_lea.sflag [#allocation4], %s1455
          %s1457 = sand.u32 %s160, 1
          %s1458 = smul.addr %s1457, 4
          %s1459 = scalar_lea.vmem [#allocation3], %s1458
          %1461 = dma.done %s1456, 64
        $region79: #{tpu_custom_call.1} parent=74 // pred_fallthru
          _
      $region75: #{tpu_custom_call.1} parent=5 // pred_fallthru
        _
    $region6: #{tpu_custom_call.1} parent=1 // loop_footer
      %s19 = sadd.s32 1, %s15
    $region7: #{tpu_custom_call.1} parent=1 // loop_footer_branch
      %14 = sbr.rel target = $region3
    $region8: #{tpu_custom_call.1} parent=1 // loop_exit
      _
    %1462 = vsyncpa [#allocation4], 1
    %s1463 = scalar_lea.sflag [#allocation4], 1
    %1464 = vsyncpa %s1463, 1

</llo_original>
